<compile_context>
chip_gen: v6e
topology: v6e:2x2x1
jax: 0.10.0
libtpu: 0.0.40
codegen_flags: <defaults>
</compile_context>

<pallas_src>
import functools

import jax
import jax.numpy as jnp
from jax.experimental import pallas as pl
from jax.experimental.pallas import tpu as pltpu


# ---------------------------------------------------------------------------
# Pallas kernel: one fused GCN layer on a tile of node rows.
# ---------------------------------------------------------------------------
def _gcn_layer_kernel(a_ref, x_ref, w_ref, b_ref, out_ref, *, apply_relu):
    """out_tile = act((A_tile @ X) @ W + b)

    a_ref  : (block_m, N)       bf16  row-tile of the normalized adjacency
    x_ref  : (N, C_in)          bf16  full node features (resident across steps)
    w_ref  : (C_in, C_out)      bf16  weight stored (in, out)  -> y = x @ W
    b_ref  : (1, C_out)         f32   bias
    out_ref: (block_m, C_out)
    """
    # Aggregation: message passing over the graph (bf16 MXU, f32 accumulate).
    agg = jnp.dot(a_ref[...], x_ref[...], preferred_element_type=jnp.float32)
    # Feature transform (bf16 MXU operands, f32 accumulate).
    h = jnp.dot(agg.astype(jnp.bfloat16), w_ref[...],
                preferred_element_type=jnp.float32)
    h = h + b_ref[...]
    if apply_relu:
        h = jnp.maximum(h, 0.0)
    out_ref[...] = h.astype(out_ref.dtype)


def gcn_layer(a_norm, x, w, b, *, apply_relu, out_dtype, block_m=256):
    """One GCNConv layer: act((A_norm @ x) @ w + b), tiled over node rows."""
    n = a_norm.shape[0]
    c_in = x.shape[1]
    c_out = w.shape[1]
    block_m = min(block_m, n)
    assert n % block_m == 0, "num_nodes must be divisible by block_m"

    kernel = functools.partial(_gcn_layer_kernel, apply_relu=apply_relu)
    return pl.pallas_call(
        kernel,
        out_shape=jax.ShapeDtypeStruct((n, c_out), out_dtype),
        grid=(n // block_m,),
        in_specs=[
            pl.BlockSpec((block_m, n), lambda i: (i, 0)),    # A_norm row tile
            pl.BlockSpec((n, c_in), lambda i: (0, 0)),       # full X (resident)
            pl.BlockSpec((c_in, c_out), lambda i: (0, 0)),   # full W (resident)
            pl.BlockSpec((1, c_out), lambda i: (0, 0)),      # bias
        ],
        out_specs=pl.BlockSpec((block_m, c_out), lambda i: (i, 0)),
        compiler_params=pltpu.CompilerParams(
            dimension_semantics=("parallel",)),
    )(a_norm, x, w, b)


# ---------------------------------------------------------------------------
# Graph preprocessing (plain JAX): edge_index -> dense normalized adjacency.
# ---------------------------------------------------------------------------
def gcn_norm_dense(edge_index, num_nodes):
    """Dense D^-1/2 (A + I) D^-1/2 from a (2, E) edge_index (src, dst)."""
    src, dst = edge_index[0], edge_index[1]
    a = jnp.zeros((num_nodes, num_nodes), jnp.float32)
    a = a.at[dst, src].set(1.0)                      # message src -> dst
    a = a + jnp.eye(num_nodes, dtype=jnp.float32)    # self-loops
    deg = jnp.sum(a, axis=1)
    d_inv_sqrt = jax.lax.rsqrt(jnp.maximum(deg, 1.0))
    return a * d_inv_sqrt[:, None] * d_inv_sqrt[None, :]


# ---------------------------------------------------------------------------
# GCNEncoder forward (2 fused GCNConv kernels).
# ---------------------------------------------------------------------------
def gcn_encoder_forward(x, edge_index, params, *, block_m=256):
    """params = [(W1, b1), (W2, b2)] with W stored as (in_features, out_features)."""
    (w1, b1), (w2, b2) = params
    n = x.shape[0]
    c_out = w2.shape[1]

    a_norm = gcn_norm_dense(edge_index, n)

    # bf16 MXU operands (f32 accumulation happens inside the kernels).
    a_bf = a_norm.astype(jnp.bfloat16)
    x_bf = x.astype(jnp.bfloat16)
    w1_bf = w1.astype(jnp.bfloat16)

    # Pad out_channels up to a lane-dense multiple of 128 (zero columns) so
    # the layer-2 matmul and final store are unmasked; slice after the kernel.
    c_out_pad = ((c_out + 127) // 128) * 128
    w2_p = jnp.pad(w2, ((0, 0), (0, c_out_pad - c_out))).astype(jnp.bfloat16)
    b2_p = jnp.pad(b2, ((0, 0), (0, c_out_pad - c_out)))

    h1 = gcn_layer(a_bf, x_bf, w1_bf, b1,
                   apply_relu=True, out_dtype=jnp.bfloat16, block_m=block_m)
    z_p = gcn_layer(a_bf, h1, w2_p, b2_p,
                    apply_relu=False, out_dtype=jnp.float32, block_m=block_m)
    return z_p[:, :c_out]


# ---------------------------------------------------------------------------
# Reference (plain JAX, mirrors the kernel's bf16-operand / f32-accum path).
# ---------------------------------------------------------------------------
def gcn_encoder_reference(x, edge_index, params):
    (w1, b1), (w2, b2) = params
    n = x.shape[0]
    a = gcn_norm_dense(edge_index, n)

    def q(v):  # bf16 quantization of matmul operands, as in the kernel
        return v.astype(jnp.bfloat16).astype(jnp.float32)

    agg1 = jnp.dot(q(a), q(x), precision="highest")
    h1 = jnp.maximum(jnp.dot(q(agg1), q(w1), precision="highest") + b1, 0.0)
    h1 = q(h1)  # layer-1 output is stored in bf16 by the kernel
    agg2 = jnp.dot(q(a), h1, precision="highest")
    z = jnp.dot(q(agg2), q(w2), precision="highest") + b2
    return z


def init_gcn_params(key, in_channels, out_channels, hid_dim):
    """Glorot-uniform weights (stored as (in, out)), zero bias — like PyG GCNConv."""
    k1, k2 = jax.random.split(key)

    def glorot(k, n_in, n_out):
        bound = jnp.sqrt(6.0 / (n_in + n_out))
        return jax.random.uniform(k, (n_in, n_out), jnp.float32, -bound, bound)

    w1 = glorot(k1, in_channels, hid_dim)
    b1 = jnp.zeros((1, hid_dim), jnp.float32)
    w2 = glorot(k2, hid_dim, out_channels)
    b2 = jnp.zeros((1, out_channels), jnp.float32)
    return [(w1, b1), (w2, b2)]


if __name__ == "__main__":
    num_nodes = 512
    in_channels = 128
    hid_dim = 256          # module default
    out_channels = 64
    num_raw_edges = 2048

    key = jax.random.PRNGKey(0)
    k_src, k_dst, k_x, k_params = jax.random.split(key, 4)

    # Deterministic random undirected graph (both directions, no self-loops).
    src = jax.random.randint(k_src, (num_raw_edges,), 0, num_nodes, jnp.int32)
    dst = jax.random.randint(k_dst, (num_raw_edges,), 0, num_nodes, jnp.int32)
    dst = jnp.where(src == dst, (dst + 1) % num_nodes, dst)
    edge_index = jnp.stack(
        [jnp.concatenate([src, dst]), jnp.concatenate([dst, src])], axis=0)

    x = jax.random.normal(k_x, (num_nodes, in_channels), jnp.float32)
    params = init_gcn_params(k_params, in_channels, out_channels, hid_dim)

    fwd = jax.jit(functools.partial(gcn_encoder_forward, block_m=256))
    z = fwd(x, edge_index, params)
    jax.block_until_ready(z)

    z_ref = gcn_encoder_reference(x, edge_index, params)

    assert z.shape == (num_nodes, out_channels)
    max_err = float(jnp.max(jnp.abs(z - z_ref)))
    assert jnp.allclose(z, z_ref, atol=2e-2, rtol=2e-2), max_err

    print("KERNEL_OK")
</pallas_src>

<mosaic_0001>
module attributes {stable_mosaic.version = 11 : i64} {
  func.func @_gcn_layer_kernel(%arg0: i32, %arg1: memref<256x512xbf16, #tpu.memory_space<vmem>>, %arg2: memref<512x128xbf16, #tpu.memory_space<vmem>>, %arg3: memref<128x256xbf16, #tpu.memory_space<vmem>>, %arg4: memref<1x256xf32, #tpu.memory_space<vmem>>, %arg5: memref<256x256xbf16, #tpu.memory_space<vmem>>) attributes {dimension_semantics = [#tpu.dimension_semantics<parallel>], iteration_bounds = array<i64: 2>, scalar_prefetch = 0 : i64, scratch_operands = 0 : i64, tpu.core_type = #tpu.core_type<tc>, window_params = [{transform_indices = @transform_0, window_bounds = array<i64: 256, 512>}, {pipeline_mode = #tpu.pipeline_mode<synchronous>, transform_indices = @transform_1, window_bounds = array<i64: 512, 128>}, {pipeline_mode = #tpu.pipeline_mode<synchronous>, transform_indices = @transform_2, window_bounds = array<i64: 128, 256>}, {pipeline_mode = #tpu.pipeline_mode<synchronous>, transform_indices = @transform_3, window_bounds = array<i64: 1, 256>}, {transform_indices = @transform_4, window_bounds = array<i64: 256, 256>}]} {
    %c0 = arith.constant 0 : index
    %c0_0 = arith.constant 0 : index
    %0 = vector.load %arg1[%c0, %c0_0] : memref<256x512xbf16, #tpu.memory_space<vmem>>, vector<256x512xbf16>
    %c0_1 = arith.constant 0 : index
    %c0_2 = arith.constant 0 : index
    %1 = vector.load %arg2[%c0_1, %c0_2] : memref<512x128xbf16, #tpu.memory_space<vmem>>, vector<512x128xbf16>
    %cst = arith.constant dense<0.000000e+00> : vector<256x128xf32>
    %2 = tpu.matmul %0, %1, %cst {dimension_numbers = #tpu.dot_dimension_numbers<[1], [0], [0], [1], [0, 0, 1, 1], [], []>} : vector<256x512xbf16>, vector<512x128xbf16>, vector<256x128xf32> -> vector<256x128xf32>
    %3 = arith.truncf %2 : vector<256x128xf32> to vector<256x128xbf16>
    %c0_3 = arith.constant 0 : index
    %c0_4 = arith.constant 0 : index
    %4 = vector.load %arg3[%c0_3, %c0_4] : memref<128x256xbf16, #tpu.memory_space<vmem>>, vector<128x256xbf16>
    %cst_5 = arith.constant dense<0.000000e+00> : vector<256x256xf32>
    %5 = tpu.matmul %3, %4, %cst_5 {dimension_numbers = #tpu.dot_dimension_numbers<[1], [0], [0], [1], [0, 0, 1, 1], [], []>} : vector<256x128xbf16>, vector<128x256xbf16>, vector<256x256xf32> -> vector<256x256xf32>
    %c0_6 = arith.constant 0 : index
    %c0_7 = arith.constant 0 : index
    %6 = vector.load %arg4[%c0_6, %c0_7] : memref<1x256xf32, #tpu.memory_space<vmem>>, vector<1x256xf32>
    %7 = vector.broadcast %6 : vector<1x256xf32> to vector<256x256xf32>
    %8 = arith.addf %5, %7 : vector<256x256xf32>
    %cst_8 = arith.constant 0.000000e+00 : f32
    %9 = vector.broadcast %cst_8 : f32 to vector<256x256xf32>
    %10 = arith.maximumf %8, %9 : vector<256x256xf32>
    %11 = arith.truncf %10 : vector<256x256xf32> to vector<256x256xbf16>
    %c0_9 = arith.constant 0 : index
    %c0_10 = arith.constant 0 : index
    %12 = vector.load %arg5[%c0_9, %c0_10] : memref<256x256xbf16, #tpu.memory_space<vmem>>, vector<256x256xbf16>
    tpu.vector_store %arg5[%c0_9, %c0_10], %11 {strides = array<i32>} : memref<256x256xbf16, #tpu.memory_space<vmem>>, vector<256x256xbf16>,
    return
  }
  func.func @transform_0(%arg0: i32) -> (i32, i32) {
    %c0_i32 = arith.constant 0 : i32
    %c0_i32_0 = arith.constant 0 : i32
    return %arg0, %c0_i32 : i32, i32
  }
  func.func @transform_1(%arg0: i32) -> (i32, i32) {
    %c0_i32 = arith.constant 0 : i32
    %c0_i32_0 = arith.constant 0 : i32
    %c0_i32_1 = arith.constant 0 : i32
    return %c0_i32, %c0_i32_0 : i32, i32
  }
  func.func @transform_2(%arg0: i32) -> (i32, i32) {
    %c0_i32 = arith.constant 0 : i32
    %c0_i32_0 = arith.constant 0 : i32
    %c0_i32_1 = arith.constant 0 : i32
    return %c0_i32, %c0_i32_0 : i32, i32
  }
  func.func @transform_3(%arg0: i32) -> (i32, i32) {
    %c0_i32 = arith.constant 0 : i32
    %c0_i32_0 = arith.constant 0 : i32
    %c0_i32_1 = arith.constant 0 : i32
    return %c0_i32, %c0_i32_0 : i32, i32
  }
  func.func @transform_4(%arg0: i32) -> (i32, i32) {
    %c0_i32 = arith.constant 0 : i32
    %c0_i32_0 = arith.constant 0 : i32
    return %arg0, %c0_i32 : i32, i32
  }
}

module attributes {stable_mosaic.version = 11 : i64} {
  func.func @_gcn_layer_kernel(%arg0: i32, %arg1: memref<256x512xbf16, #tpu.memory_space<vmem>>, %arg2: memref<512x256xbf16, #tpu.memory_space<vmem>>, %arg3: memref<256x128xbf16, #tpu.memory_space<vmem>>, %arg4: memref<1x128xf32, #tpu.memory_space<vmem>>, %arg5: memref<256x128xf32, #tpu.memory_space<vmem>>) attributes {dimension_semantics = [#tpu.dimension_semantics<parallel>], iteration_bounds = array<i64: 2>, scalar_prefetch = 0 : i64, scratch_operands = 0 : i64, tpu.core_type = #tpu.core_type<tc>, window_params = [{transform_indices = @transform_0, window_bounds = array<i64: 256, 512>}, {pipeline_mode = #tpu.pipeline_mode<synchronous>, transform_indices = @transform_1, window_bounds = array<i64: 512, 256>}, {pipeline_mode = #tpu.pipeline_mode<synchronous>, transform_indices = @transform_2, window_bounds = array<i64: 256, 128>}, {pipeline_mode = #tpu.pipeline_mode<synchronous>, transform_indices = @transform_3, window_bounds = array<i64: 1, 128>}, {transform_indices = @transform_4, window_bounds = array<i64: 256, 128>}]} {
    %c0 = arith.constant 0 : index
    %c0_0 = arith.constant 0 : index
    %0 = vector.load %arg1[%c0, %c0_0] : memref<256x512xbf16, #tpu.memory_space<vmem>>, vector<256x512xbf16>
    %c0_1 = arith.constant 0 : index
    %c0_2 = arith.constant 0 : index
    %1 = vector.load %arg2[%c0_1, %c0_2] : memref<512x256xbf16, #tpu.memory_space<vmem>>, vector<512x256xbf16>
    %cst = arith.constant dense<0.000000e+00> : vector<256x256xf32>
    %2 = tpu.matmul %0, %1, %cst {dimension_numbers = #tpu.dot_dimension_numbers<[1], [0], [0], [1], [0, 0, 1, 1], [], []>} : vector<256x512xbf16>, vector<512x256xbf16>, vector<256x256xf32> -> vector<256x256xf32>
    %3 = arith.truncf %2 : vector<256x256xf32> to vector<256x256xbf16>
    %c0_3 = arith.constant 0 : index
    %c0_4 = arith.constant 0 : index
    %4 = vector.load %arg3[%c0_3, %c0_4] : memref<256x128xbf16, #tpu.memory_space<vmem>>, vector<256x128xbf16>
    %cst_5 = arith.constant dense<0.000000e+00> : vector<256x128xf32>
    %5 = tpu.matmul %3, %4, %cst_5 {dimension_numbers = #tpu.dot_dimension_numbers<[1], [0], [0], [1], [0, 0, 1, 1], [], []>} : vector<256x256xbf16>, vector<256x128xbf16>, vector<256x128xf32> -> vector<256x128xf32>
    %c0_6 = arith.constant 0 : index
    %c0_7 = arith.constant 0 : index
    %6 = vector.load %arg4[%c0_6, %c0_7] : memref<1x128xf32, #tpu.memory_space<vmem>>, vector<1x128xf32>
    %7 = vector.broadcast %6 : vector<1x128xf32> to vector<256x128xf32>
    %8 = arith.addf %5, %7 : vector<256x128xf32>
    %c0_8 = arith.constant 0 : index
    %c0_9 = arith.constant 0 : index
    %9 = vector.load %arg5[%c0_8, %c0_9] : memref<256x128xf32, #tpu.memory_space<vmem>>, vector<256x128xf32>
    tpu.vector_store %arg5[%c0_8, %c0_9], %8 {strides = array<i32>} : memref<256x128xf32, #tpu.memory_space<vmem>>, vector<256x128xf32>,
    return
  }
  func.func @transform_0(%arg0: i32) -> (i32, i32) {
    %c0_i32 = arith.constant 0 : i32
    %c0_i32_0 = arith.constant 0 : i32
    return %arg0, %c0_i32 : i32, i32
  }
  func.func @transform_1(%arg0: i32) -> (i32, i32) {
    %c0_i32 = arith.constant 0 : i32
    %c0_i32_0 = arith.constant 0 : i32
    %c0_i32_1 = arith.constant 0 : i32
    return %c0_i32, %c0_i32_0 : i32, i32
  }
  func.func @transform_2(%arg0: i32) -> (i32, i32) {
    %c0_i32 = arith.constant 0 : i32
    %c0_i32_0 = arith.constant 0 : i32
    %c0_i32_1 = arith.constant 0 : i32
    return %c0_i32, %c0_i32_0 : i32, i32
  }
  func.func @transform_3(%arg0: i32) -> (i32, i32) {
    %c0_i32 = arith.constant 0 : i32
    %c0_i32_0 = arith.constant 0 : i32
    %c0_i32_1 = arith.constant 0 : i32
    return %c0_i32, %c0_i32_0 : i32, i32
  }
  func.func @transform_4(%arg0: i32) -> (i32, i32) {
    %c0_i32 = arith.constant 0 : i32
    %c0_i32_0 = arith.constant 0 : i32
    return %arg0, %c0_i32 : i32, i32
  }
}

</mosaic_0001>

<llo_original>
// kernel: gcn_encoder_forward.2
$region0: #{gcn_encoder_forward.2}
  #allocation0 [shape = 'u32[]', space=smem, size = 0x4, offset = 0x4, fixed_abs, tag = 'smem constant byte address 0x4 - core index']
  #allocation1 [shape = 'u32[144,128]{1,0:T(1,128)}', space=vmem, size = 0x12000, scoped, tag = 'internal scratch']
  %s0 = inlined_call_operand.vmem [shape: bf16[512,512], index: 0, kind: input, shape index: {}]
  %s1 = inlined_call_operand.vmem [shape: bf16[512,128], index: 1, kind: input, shape index: {}]
  %s2 = inlined_call_operand.vmem [shape: bf16[128,256], index: 2, kind: input, shape index: {}]
  %s3 = inlined_call_operand.vmem [shape: f32[1,256], index: 3, kind: input, shape index: {}]
  %s4 = inlined_call_operand.vmem [shape: bf16[512,256], index: 4, kind: output, shape index: {}]
  %s5 = sld [smem:[#allocation0]]
  $region49: #{gcn_encoder_forward.2} parent=0
    _
  %s7 = ssub.s32 1, %s5
  %s8 = scalar_select 0, %s7, %s5
  loop: start=0, step=1, limit=4
  $region2: #{gcn_encoder_forward.2} parent=0 // loop_pre_header
    _
  $region3: #{gcn_encoder_forward.2} parent=0 // loop_header
    %s10 = sphi 0, %s14
    %p11 = scmp.ge.s32.totalorder %s10, 4
    %s20 = sphi 0, %s22
    %s23 = sphi 0, %s20
    %s24 = sphi 0, %s23
    %s40 = sphi 0, %s24
    %s44 = sphi 0, %s44
    %s46 = sphi 0, %s44
    %s47 = sphi 0, %s46
    %s61 = sphi 0, %s47
    %s65 = sphi 0, %s65
    %s67 = sphi 0, %s65
    %s68 = sphi 0, %s67
    %s82 = sphi 0, %s68
    %s86 = sphi 0, %s86
    %s88 = sphi 0, %s86
    %s89 = sphi 0, %s88
    %s103 = sphi 0, %s89
    %s109 = sphi 0, %s111
    %s112 = sphi 0, %s109
    %s113 = sphi 0, %s112
    %s129 = sphi 0, %s113
  $region4: #{gcn_encoder_forward.2} parent=0 // loop_header_branch
    %13 = sbr.rel (%p11) target = $region8
  $region5: #{gcn_encoder_forward.2} parent=0 // loop_body
    %s15 = ssub.s32 %s10, 1
    %s16 = ssub.s32 %s10, 2
    %s17 = sadd.s32 %s10, 1
    %s18 = ssub.s32 %s10, %s17
    %p19 = scmp.eq.s32.totalorder %s18, 0
    %s21 = sadd.s32 %s20, 1
    %s22 = scalar_select %p19, %s20, %s21
    %p25 = pneg %p19
    %p26 = scmp.eq.s32.totalorder %s10, 1
    %p27 = por %p25, %p26
    %p28 = scmp.ne.s32.totalorder %s20, %s23
    %p29 = scmp.eq.s32.totalorder %s10, 0
    %p30 = por %p28, %p29
    %p31 = scmp.ne.s32.totalorder %s20, %s23
    %p32 = scmp.eq.s32.totalorder %s15, 1
    %p33 = por %p31, %p32
    %p34 = scmp.ne.s32.totalorder %s23, %s24
    %p35 = scmp.eq.s32.totalorder %s15, 0
    %p36 = por %p34, %p35
    %p37 = scmp.ne.s32.totalorder %s23, %s24
    %p38 = scmp.eq.s32.totalorder %s16, 1
    %p39 = por %p37, %p38
    %p41 = scmp.ne.s32.totalorder %s24, %s40
    %p42 = scmp.eq.s32.totalorder %s16, 0
    %p43 = por %p41, %p42
    %s45 = sadd.s32 %s44, 1
    %p48 = scmp.eq.s32.totalorder %s10, 1
    %p49 = scmp.ne.s32.totalorder %s44, %s46
    %p50 = scmp.eq.s32.totalorder %s10, 0
    %p51 = por %p49, %p50
    %p52 = scmp.ne.s32.totalorder %s44, %s46
    %p53 = scmp.eq.s32.totalorder %s15, 1
    %p54 = por %p52, %p53
    %p55 = scmp.ne.s32.totalorder %s46, %s47
    %p56 = scmp.eq.s32.totalorder %s15, 0
    %p57 = por %p55, %p56
    %p58 = scmp.ne.s32.totalorder %s46, %s47
    %p59 = scmp.eq.s32.totalorder %s16, 1
    %p60 = por %p58, %p59
    %p62 = scmp.ne.s32.totalorder %s47, %s61
    %p63 = scmp.eq.s32.totalorder %s16, 0
    %p64 = por %p62, %p63
    %s66 = sadd.s32 %s65, 1
    %p69 = scmp.eq.s32.totalorder %s10, 1
    %p70 = scmp.ne.s32.totalorder %s65, %s67
    %p71 = scmp.eq.s32.totalorder %s10, 0
    %p72 = por %p70, %p71
    %p73 = scmp.ne.s32.totalorder %s65, %s67
    %p74 = scmp.eq.s32.totalorder %s15, 1
    %p75 = por %p73, %p74
    %p76 = scmp.ne.s32.totalorder %s67, %s68
    %p77 = scmp.eq.s32.totalorder %s15, 0
    %p78 = por %p76, %p77
    %p79 = scmp.ne.s32.totalorder %s67, %s68
    %p80 = scmp.eq.s32.totalorder %s16, 1
    %p81 = por %p79, %p80
    %p83 = scmp.ne.s32.totalorder %s68, %s82
    %p84 = scmp.eq.s32.totalorder %s16, 0
    %p85 = por %p83, %p84
    %s87 = sadd.s32 %s86, 1
    %p90 = scmp.eq.s32.totalorder %s10, 1
    %p91 = scmp.ne.s32.totalorder %s86, %s88
    %p92 = scmp.eq.s32.totalorder %s10, 0
    %p93 = por %p91, %p92
    %p94 = scmp.ne.s32.totalorder %s86, %s88
    %p95 = scmp.eq.s32.totalorder %s15, 1
    %p96 = por %p94, %p95
    %p97 = scmp.ne.s32.totalorder %s88, %s89
    %p98 = scmp.eq.s32.totalorder %s15, 0
    %p99 = por %p97, %p98
    %p100 = scmp.ne.s32.totalorder %s88, %s89
    %p101 = scmp.eq.s32.totalorder %s16, 1
    %p102 = por %p100, %p101
    %p104 = scmp.ne.s32.totalorder %s89, %s103
    %p105 = scmp.eq.s32.totalorder %s16, 0
    %p106 = por %p104, %p105
    %s107 = ssub.s32 %s10, %s17
    %p108 = scmp.eq.s32.totalorder %s107, 0
    %s110 = sadd.s32 %s109, 1
    %s111 = scalar_select %p108, %s109, %s110
    %p114 = pneg %p108
    %p115 = scmp.eq.s32.totalorder %s10, 1
    %p116 = por %p114, %p115
    %p117 = scmp.ne.s32.totalorder %s109, %s112
    %p118 = scmp.eq.s32.totalorder %s10, 0
    %p119 = por %p117, %p118
    %p120 = scmp.ne.s32.totalorder %s109, %s112
    %p121 = scmp.eq.s32.totalorder %s15, 1
    %p122 = por %p120, %p121
    %p123 = scmp.ne.s32.totalorder %s112, %s113
    %p124 = scmp.eq.s32.totalorder %s15, 0
    %p125 = por %p123, %p124
    %p126 = scmp.ne.s32.totalorder %s112, %s113
    %p127 = scmp.eq.s32.totalorder %s16, 1
    %p128 = por %p126, %p127
    %p130 = scmp.ne.s32.totalorder %s113, %s129
    %p131 = scmp.eq.s32.totalorder %s16, 0
    %p132 = por %p130, %p131
    %p133 = scmp.le.s32.totalorder 1, %s10
    %p134 = scmp.lt.s32.totalorder %s10, 3
    %p135 = pnand %p133, %p134
    %p136 = pneg %p135
    // Predicated region
    $region9: #{gcn_encoder_forward.2} parent=5 // pred_check
      _
    $region10: #{gcn_encoder_forward.2} parent=5 // pred_check_branch
      %138 = sbr.rel (%p135) target = $region12
    $region11: #{gcn_encoder_forward.2} parent=5 // pred_region
      %s139 = ssub.s32 %s10, 1
      // Predicated region
      $region13: #{gcn_encoder_forward.2} parent=11 // pred_check
        %p140 = pneg %p57
      $region14: #{gcn_encoder_forward.2} parent=11 // pred_check_branch
        %142 = sbr.rel (%p140) target = $region16
      $region15: #{gcn_encoder_forward.2} parent=11 // pred_region
        _
      $region16: #{gcn_encoder_forward.2} parent=11 // pred_fallthru
        _
      // Predicated region
      $region17: #{gcn_encoder_forward.2} parent=11 // pred_check
        %p143 = pneg %p78
      $region18: #{gcn_encoder_forward.2} parent=11 // pred_check_branch
        %145 = sbr.rel (%p143) target = $region20
      $region19: #{gcn_encoder_forward.2} parent=11 // pred_region
        _
      $region20: #{gcn_encoder_forward.2} parent=11 // pred_fallthru
        _
      // Predicated region
      $region21: #{gcn_encoder_forward.2} parent=11 // pred_check
        %p146 = pneg %p99
      $region22: #{gcn_encoder_forward.2} parent=11 // pred_check_branch
        %148 = sbr.rel (%p146) target = $region24
      $region23: #{gcn_encoder_forward.2} parent=11 // pred_region
        _
      $region24: #{gcn_encoder_forward.2} parent=11 // pred_fallthru
        _
    $region12: #{gcn_encoder_forward.2} parent=5 // pred_fallthru
      _
    %p149 = scmp.lt.s32.totalorder %s10, 2
    // Predicated region
    $region25: #{gcn_encoder_forward.2} parent=5 // pred_check
      %p150 = pneg %p149
    $region26: #{gcn_encoder_forward.2} parent=5 // pred_check_branch
      %152 = sbr.rel (%p150) target = $region28
    $region27: #{gcn_encoder_forward.2} parent=5 // pred_region
      // Predicated region
      $region29: #{gcn_encoder_forward.2} parent=27 // pred_check
        %p153 = pneg %p30
      $region30: #{gcn_encoder_forward.2} parent=27 // pred_check_branch
        %155 = sbr.rel (%p153) target = $region32
      $region31: #{gcn_encoder_forward.2} parent=27 // pred_region
        %s156 = smul.u32 32, %s10
        %p157 = scmp.lt.s32.totalorder %s156, 63
        %s158 = scalar_select %p157, %s156, 63
        %s159 = smul.addr %s158, 4
        %s160 = smul.addr %s159, 4
        %s161 = scalar_lea.vmem %s0, %s160
        %s162 = smul.u32 32, %s10
      $region32: #{gcn_encoder_forward.2} parent=27 // pred_fallthru
        _
    $region28: #{gcn_encoder_forward.2} parent=5 // pred_fallthru
      _
    %p163 = scmp.le.s32.totalorder 1, %s10
    %p164 = scmp.lt.s32.totalorder %s10, 3
    %p165 = pnand %p163, %p164
    %p166 = pneg %p165
    // Predicated region
    $region33: #{gcn_encoder_forward.2} parent=5 // pred_check
      _
    $region34: #{gcn_encoder_forward.2} parent=5 // pred_check_branch
      %168 = sbr.rel (%p165) target = $region36
    $region35: #{gcn_encoder_forward.2} parent=5 // pred_region
      %s169 = ssub.s32 %s10, 1
      %s170 = smul.u32 32, %s15
      %p171 = scmp.lt.s32.totalorder %s170, 63
      %s172 = scalar_select %p171, %s170, 63
      %s173 = smul.addr %s172, 4
      %s174 = smul.addr %s173, 4
      %s175 = scalar_lea.vmem %s0, %s174
      %p176 = pneg %p36
      %p177 = pneg %p33
      %p178 = pneg %p57
      %p179 = pneg %p54
      %p180 = pneg %p78
      %p181 = pneg %p75
      %p182 = pneg %p99
      %p183 = pneg %p96
      %p184 = pneg %p125
      %p185 = pneg %p122
      %s186 = smul.u32 32, %s15
      %p187 = scmp.lt.s32.totalorder %s186, 63
      %s188 = scalar_select %p187, %s186, 63
      %s189 = smul.addr %s188, 2
      %s190 = smul.addr %s189, 4
      %s191 = scalar_lea.vmem %s4, %s190
      %s192 = smul.u32 32, %s15
      %p193 = scmp.lt.s32.totalorder %s192, 63
      %s194 = scalar_select %p193, %s192, 63
      %s195 = smul.addr %s194, 4
      %s196 = smul.addr %s195, 4
      %s197 = scalar_lea.vmem %s0, %s196
      %s198 = smul.u32 32, %s15
      %s199 = smul.u32 32, %s15
      %p200 = scmp.lt.s32.totalorder %s199, 63
      %s201 = scalar_select %p200, %s199, 63
      %s202 = smul.addr %s201, 2
      %s203 = smul.addr %s202, 4
      %s204 = scalar_lea.vmem %s4, %s203
      %s205 = smul.u32 32, %s15
      %v207 = vld [vmem:[%s197] sm:$0xff]
      %v208 = vld [vmem:[%s197 + $0x8] sm:$0xff]
      %v209 = vld [vmem:[%s197 + $0x10] sm:$0xff]
      %v210 = vld [vmem:[%s197 + $0x18] sm:$0xff]
      %v211 = vld [vmem:[%s197 + $0x20] sm:$0xff]
      %v212 = vld [vmem:[%s197 + $0x28] sm:$0xff]
      %v213 = vld [vmem:[%s197 + $0x30] sm:$0xff]
      %v214 = vld [vmem:[%s197 + $0x38] sm:$0xff]
      %v215 = vld [vmem:[%s197 + $0x40] sm:$0xff]
      %v216 = vld [vmem:[%s197 + $0x48] sm:$0xff]
      %v217 = vld [vmem:[%s197 + $0x50] sm:$0xff]
      %v218 = vld [vmem:[%s197 + $0x58] sm:$0xff]
      %v219 = vld [vmem:[%s197 + $0x60] sm:$0xff]
      %v220 = vld [vmem:[%s197 + $0x68] sm:$0xff]
      %v221 = vld [vmem:[%s197 + $0x70] sm:$0xff]
      %v222 = vld [vmem:[%s197 + $0x78] sm:$0xff]
      %v223 = vld [vmem:[%s197 + $0x80] sm:$0xff]
      %v224 = vld [vmem:[%s197 + $0x88] sm:$0xff]
      %v225 = vld [vmem:[%s197 + $0x90] sm:$0xff]
      %v226 = vld [vmem:[%s197 + $0x98] sm:$0xff]
      %v227 = vld [vmem:[%s197 + $0xa0] sm:$0xff]
      %v228 = vld [vmem:[%s197 + $0xa8] sm:$0xff]
      %v229 = vld [vmem:[%s197 + $0xb0] sm:$0xff]
      %v230 = vld [vmem:[%s197 + $0xb8] sm:$0xff]
      %v231 = vld [vmem:[%s197 + $0xc0] sm:$0xff]
      %v232 = vld [vmem:[%s197 + $0xc8] sm:$0xff]
      %v233 = vld [vmem:[%s197 + $0xd0] sm:$0xff]
      %v234 = vld [vmem:[%s197 + $0xd8] sm:$0xff]
      %v235 = vld [vmem:[%s197 + $0xe0] sm:$0xff]
      %v236 = vld [vmem:[%s197 + $0xe8] sm:$0xff]
      %v237 = vld [vmem:[%s197 + $0xf0] sm:$0xff]
      %v238 = vld [vmem:[%s197 + $0xf8] sm:$0xff]
      %v239 = vld [vmem:[%s197 + $0x100] sm:$0xff]
      %v240 = vld [vmem:[%s197 + $0x108] sm:$0xff]
      %v241 = vld [vmem:[%s197 + $0x110] sm:$0xff]
      %v242 = vld [vmem:[%s197 + $0x118] sm:$0xff]
      %v243 = vld [vmem:[%s197 + $0x120] sm:$0xff]
      %v244 = vld [vmem:[%s197 + $0x128] sm:$0xff]
      %v245 = vld [vmem:[%s197 + $0x130] sm:$0xff]
      %v246 = vld [vmem:[%s197 + $0x138] sm:$0xff]
      %v247 = vld [vmem:[%s197 + $0x140] sm:$0xff]
      %v248 = vld [vmem:[%s197 + $0x148] sm:$0xff]
      %v249 = vld [vmem:[%s197 + $0x150] sm:$0xff]
      %v250 = vld [vmem:[%s197 + $0x158] sm:$0xff]
      %v251 = vld [vmem:[%s197 + $0x160] sm:$0xff]
      %v252 = vld [vmem:[%s197 + $0x168] sm:$0xff]
      %v253 = vld [vmem:[%s197 + $0x170] sm:$0xff]
      %v254 = vld [vmem:[%s197 + $0x178] sm:$0xff]
      %v255 = vld [vmem:[%s197 + $0x180] sm:$0xff]
      %v256 = vld [vmem:[%s197 + $0x188] sm:$0xff]
      %v257 = vld [vmem:[%s197 + $0x190] sm:$0xff]
      %v258 = vld [vmem:[%s197 + $0x198] sm:$0xff]
      %v259 = vld [vmem:[%s197 + $0x1a0] sm:$0xff]
      %v260 = vld [vmem:[%s197 + $0x1a8] sm:$0xff]
      %v261 = vld [vmem:[%s197 + $0x1b0] sm:$0xff]
      %v262 = vld [vmem:[%s197 + $0x1b8] sm:$0xff]
      %v263 = vld [vmem:[%s197 + $0x1c0] sm:$0xff]
      %v264 = vld [vmem:[%s197 + $0x1c8] sm:$0xff]
      %v265 = vld [vmem:[%s197 + $0x1d0] sm:$0xff]
      %v266 = vld [vmem:[%s197 + $0x1d8] sm:$0xff]
      %v267 = vld [vmem:[%s197 + $0x1e0] sm:$0xff]
      %v268 = vld [vmem:[%s197 + $0x1e8] sm:$0xff]
      %v269 = vld [vmem:[%s197 + $0x1f0] sm:$0xff]
      %v270 = vld [vmem:[%s197 + $0x1f8] sm:$0xff]
      %v271 = vld [vmem:[%s1] sm:$0xf]
      %v272 = vld [vmem:[%s1 + $0x4] sm:$0xf]
      %v273 = vld [vmem:[%s1 + $0x8] sm:$0xf]
      %v274 = vld [vmem:[%s1 + $0xc] sm:$0xf]
      %v275 = vld [vmem:[%s1 + $0x10] sm:$0xf]
      %v276 = vld [vmem:[%s1 + $0x14] sm:$0xf]
      %v277 = vld [vmem:[%s1 + $0x18] sm:$0xf]
      %v278 = vld [vmem:[%s1 + $0x1c] sm:$0xf]
      %v279 = vld [vmem:[%s1 + $0x20] sm:$0xf]
      %v280 = vld [vmem:[%s1 + $0x24] sm:$0xf]
      %v281 = vld [vmem:[%s1 + $0x28] sm:$0xf]
      %v282 = vld [vmem:[%s1 + $0x2c] sm:$0xf]
      %v283 = vld [vmem:[%s1 + $0x30] sm:$0xf]
      %v284 = vld [vmem:[%s1 + $0x34] sm:$0xf]
      %v285 = vld [vmem:[%s1 + $0x38] sm:$0xf]
      %v286 = vld [vmem:[%s1 + $0x3c] sm:$0xf]
      %v287 = vld [vmem:[%s1 + $0x40] sm:$0xf]
      %v288 = vld [vmem:[%s1 + $0x44] sm:$0xf]
      %v289 = vld [vmem:[%s1 + $0x48] sm:$0xf]
      %v290 = vld [vmem:[%s1 + $0x4c] sm:$0xf]
      %v291 = vld [vmem:[%s1 + $0x50] sm:$0xf]
      %v292 = vld [vmem:[%s1 + $0x54] sm:$0xf]
      %v293 = vld [vmem:[%s1 + $0x58] sm:$0xf]
      %v294 = vld [vmem:[%s1 + $0x5c] sm:$0xf]
      %v295 = vld [vmem:[%s1 + $0x60] sm:$0xf]
      %v296 = vld [vmem:[%s1 + $0x64] sm:$0xf]
      %v297 = vld [vmem:[%s1 + $0x68] sm:$0xf]
      %v298 = vld [vmem:[%s1 + $0x6c] sm:$0xf]
      %v299 = vld [vmem:[%s1 + $0x70] sm:$0xf]
      %v300 = vld [vmem:[%s1 + $0x74] sm:$0xf]
      %v301 = vld [vmem:[%s1 + $0x78] sm:$0xf]
      %v302 = vld [vmem:[%s1 + $0x7c] sm:$0xf]
      %v303 = vld [vmem:[%s1 + $0x80] sm:$0xf]
      %v304 = vld [vmem:[%s1 + $0x84] sm:$0xf]
      %v305 = vld [vmem:[%s1 + $0x88] sm:$0xf]
      %v306 = vld [vmem:[%s1 + $0x8c] sm:$0xf]
      %v307 = vld [vmem:[%s1 + $0x90] sm:$0xf]
      %v308 = vld [vmem:[%s1 + $0x94] sm:$0xf]
      %v309 = vld [vmem:[%s1 + $0x98] sm:$0xf]
      %v310 = vld [vmem:[%s1 + $0x9c] sm:$0xf]
      %v311 = vld [vmem:[%s1 + $0xa0] sm:$0xf]
      %v312 = vld [vmem:[%s1 + $0xa4] sm:$0xf]
      %v313 = vld [vmem:[%s1 + $0xa8] sm:$0xf]
      %v314 = vld [vmem:[%s1 + $0xac] sm:$0xf]
      %v315 = vld [vmem:[%s1 + $0xb0] sm:$0xf]
      %v316 = vld [vmem:[%s1 + $0xb4] sm:$0xf]
      %v317 = vld [vmem:[%s1 + $0xb8] sm:$0xf]
      %v318 = vld [vmem:[%s1 + $0xbc] sm:$0xf]
      %v319 = vld [vmem:[%s1 + $0xc0] sm:$0xf]
      %v320 = vld [vmem:[%s1 + $0xc4] sm:$0xf]
      %v321 = vld [vmem:[%s1 + $0xc8] sm:$0xf]
      %v322 = vld [vmem:[%s1 + $0xcc] sm:$0xf]
      %v323 = vld [vmem:[%s1 + $0xd0] sm:$0xf]
      %v324 = vld [vmem:[%s1 + $0xd4] sm:$0xf]
      %v325 = vld [vmem:[%s1 + $0xd8] sm:$0xf]
      %v326 = vld [vmem:[%s1 + $0xdc] sm:$0xf]
      %v327 = vld [vmem:[%s1 + $0xe0] sm:$0xf]
      %v328 = vld [vmem:[%s1 + $0xe4] sm:$0xf]
      %v329 = vld [vmem:[%s1 + $0xe8] sm:$0xf]
      %v330 = vld [vmem:[%s1 + $0xec] sm:$0xf]
      %v331 = vld [vmem:[%s1 + $0xf0] sm:$0xf]
      %v332 = vld [vmem:[%s1 + $0xf4] sm:$0xf]
      %v333 = vld [vmem:[%s1 + $0xf8] sm:$0xf]
      %v334 = vld [vmem:[%s1 + $0xfc] sm:$0xf]
      %v399 = vunpack.c.l.b16 %v207
      %v400 = vunpack.c.h.b16 %v207
      %v401 = vunpack.c.l.b16 %v208
      %v402 = vunpack.c.h.b16 %v208
      %v403 = vunpack.c.l.b16 %v209
      %v404 = vunpack.c.h.b16 %v209
      %v405 = vunpack.c.l.b16 %v210
      %v406 = vunpack.c.h.b16 %v210
      %v407 = vunpack.c.l.b16 %v211
      %v408 = vunpack.c.h.b16 %v211
      %v409 = vunpack.c.l.b16 %v212
      %v410 = vunpack.c.h.b16 %v212
      %v411 = vunpack.c.l.b16 %v213
      %v412 = vunpack.c.h.b16 %v213
      %v413 = vunpack.c.l.b16 %v214
      %v414 = vunpack.c.h.b16 %v214
      %v415 = vunpack.c.l.b16 %v215
      %v416 = vunpack.c.h.b16 %v215
      %v417 = vunpack.c.l.b16 %v216
      %v418 = vunpack.c.h.b16 %v216
      %v419 = vunpack.c.l.b16 %v217
      %v420 = vunpack.c.h.b16 %v217
      %v421 = vunpack.c.l.b16 %v218
      %v422 = vunpack.c.h.b16 %v218
      %v423 = vunpack.c.l.b16 %v219
      %v424 = vunpack.c.h.b16 %v219
      %v425 = vunpack.c.l.b16 %v220
      %v426 = vunpack.c.h.b16 %v220
      %v427 = vunpack.c.l.b16 %v221
      %v428 = vunpack.c.h.b16 %v221
      %v429 = vunpack.c.l.b16 %v222
      %v430 = vunpack.c.h.b16 %v222
      %v431 = vunpack.c.l.b16 %v223
      %v432 = vunpack.c.h.b16 %v223
      %v433 = vunpack.c.l.b16 %v224
      %v434 = vunpack.c.h.b16 %v224
      %v435 = vunpack.c.l.b16 %v225
      %v436 = vunpack.c.h.b16 %v225
      %v437 = vunpack.c.l.b16 %v226
      %v438 = vunpack.c.h.b16 %v226
      %v439 = vunpack.c.l.b16 %v227
      %v440 = vunpack.c.h.b16 %v227
      %v441 = vunpack.c.l.b16 %v228
      %v442 = vunpack.c.h.b16 %v228
      %v443 = vunpack.c.l.b16 %v229
      %v444 = vunpack.c.h.b16 %v229
      %v445 = vunpack.c.l.b16 %v230
      %v446 = vunpack.c.h.b16 %v230
      %v447 = vunpack.c.l.b16 %v231
      %v448 = vunpack.c.h.b16 %v231
      %v449 = vunpack.c.l.b16 %v232
      %v450 = vunpack.c.h.b16 %v232
      %v451 = vunpack.c.l.b16 %v233
      %v452 = vunpack.c.h.b16 %v233
      %v453 = vunpack.c.l.b16 %v234
      %v454 = vunpack.c.h.b16 %v234
      %v455 = vunpack.c.l.b16 %v235
      %v456 = vunpack.c.h.b16 %v235
      %v457 = vunpack.c.l.b16 %v236
      %v458 = vunpack.c.h.b16 %v236
      %v459 = vunpack.c.l.b16 %v237
      %v460 = vunpack.c.h.b16 %v237
      %v461 = vunpack.c.l.b16 %v238
      %v462 = vunpack.c.h.b16 %v238
      %v463 = vunpack.c.l.b16 %v239
      %v464 = vunpack.c.h.b16 %v239
      %v465 = vunpack.c.l.b16 %v240
      %v466 = vunpack.c.h.b16 %v240
      %v467 = vunpack.c.l.b16 %v241
      %v468 = vunpack.c.h.b16 %v241
      %v469 = vunpack.c.l.b16 %v242
      %v470 = vunpack.c.h.b16 %v242
      %v471 = vunpack.c.l.b16 %v243
      %v472 = vunpack.c.h.b16 %v243
      %v473 = vunpack.c.l.b16 %v244
      %v474 = vunpack.c.h.b16 %v244
      %v475 = vunpack.c.l.b16 %v245
      %v476 = vunpack.c.h.b16 %v245
      %v477 = vunpack.c.l.b16 %v246
      %v478 = vunpack.c.h.b16 %v246
      %v479 = vunpack.c.l.b16 %v247
      %v480 = vunpack.c.h.b16 %v247
      %v481 = vunpack.c.l.b16 %v248
      %v482 = vunpack.c.h.b16 %v248
      %v483 = vunpack.c.l.b16 %v249
      %v484 = vunpack.c.h.b16 %v249
      %v485 = vunpack.c.l.b16 %v250
      %v486 = vunpack.c.h.b16 %v250
      %v487 = vunpack.c.l.b16 %v251
      %v488 = vunpack.c.h.b16 %v251
      %v489 = vunpack.c.l.b16 %v252
      %v490 = vunpack.c.h.b16 %v252
      %v491 = vunpack.c.l.b16 %v253
      %v492 = vunpack.c.h.b16 %v253
      %v493 = vunpack.c.l.b16 %v254
      %v494 = vunpack.c.h.b16 %v254
      %v495 = vunpack.c.l.b16 %v255
      %v496 = vunpack.c.h.b16 %v255
      %v497 = vunpack.c.l.b16 %v256
      %v498 = vunpack.c.h.b16 %v256
      %v499 = vunpack.c.l.b16 %v257
      %v500 = vunpack.c.h.b16 %v257
      %v501 = vunpack.c.l.b16 %v258
      %v502 = vunpack.c.h.b16 %v258
      %v503 = vunpack.c.l.b16 %v259
      %v504 = vunpack.c.h.b16 %v259
      %v505 = vunpack.c.l.b16 %v260
      %v506 = vunpack.c.h.b16 %v260
      %v507 = vunpack.c.l.b16 %v261
      %v508 = vunpack.c.h.b16 %v261
      %v509 = vunpack.c.l.b16 %v262
      %v510 = vunpack.c.h.b16 %v262
      %v511 = vunpack.c.l.b16 %v263
      %v512 = vunpack.c.h.b16 %v263
      %v513 = vunpack.c.l.b16 %v264
      %v514 = vunpack.c.h.b16 %v264
      %v515 = vunpack.c.l.b16 %v265
      %v516 = vunpack.c.h.b16 %v265
      %v517 = vunpack.c.l.b16 %v266
      %v518 = vunpack.c.h.b16 %v266
      %v519 = vunpack.c.l.b16 %v267
      %v520 = vunpack.c.h.b16 %v267
      %v521 = vunpack.c.l.b16 %v268
      %v522 = vunpack.c.h.b16 %v268
      %v523 = vunpack.c.l.b16 %v269
      %v524 = vunpack.c.h.b16 %v269
      %v525 = vunpack.c.l.b16 %v270
      %v526 = vunpack.c.h.b16 %v270
      %v527 = vpack.c.b16 %v403, %v399
      %v528 = vpack.c.b16 %v404, %v400
      %v529 = vpack.c.b16 %v405, %v401
      %v530 = vpack.c.b16 %v406, %v402
      %v531 = vpack.c.b16 %v411, %v407
      %v532 = vpack.c.b16 %v412, %v408
      %v533 = vpack.c.b16 %v413, %v409
      %v534 = vpack.c.b16 %v414, %v410
      %v535 = vpack.c.b16 %v419, %v415
      %v536 = vpack.c.b16 %v420, %v416
      %v537 = vpack.c.b16 %v421, %v417
      %v538 = vpack.c.b16 %v422, %v418
      %v539 = vpack.c.b16 %v427, %v423
      %v540 = vpack.c.b16 %v428, %v424
      %v541 = vpack.c.b16 %v429, %v425
      %v542 = vpack.c.b16 %v430, %v426
      %v543 = vpack.c.b16 %v435, %v431
      %v544 = vpack.c.b16 %v436, %v432
      %v545 = vpack.c.b16 %v437, %v433
      %v546 = vpack.c.b16 %v438, %v434
      %v547 = vpack.c.b16 %v443, %v439
      %v548 = vpack.c.b16 %v444, %v440
      %v549 = vpack.c.b16 %v445, %v441
      %v550 = vpack.c.b16 %v446, %v442
      %v551 = vpack.c.b16 %v451, %v447
      %v552 = vpack.c.b16 %v452, %v448
      %v553 = vpack.c.b16 %v453, %v449
      %v554 = vpack.c.b16 %v454, %v450
      %v555 = vpack.c.b16 %v459, %v455
      %v556 = vpack.c.b16 %v460, %v456
      %v557 = vpack.c.b16 %v461, %v457
      %v558 = vpack.c.b16 %v462, %v458
      %v559 = vpack.c.b16 %v467, %v463
      %v560 = vpack.c.b16 %v468, %v464
      %v561 = vpack.c.b16 %v469, %v465
      %v562 = vpack.c.b16 %v470, %v466
      %v563 = vpack.c.b16 %v475, %v471
      %v564 = vpack.c.b16 %v476, %v472
      %v565 = vpack.c.b16 %v477, %v473
      %v566 = vpack.c.b16 %v478, %v474
      %v567 = vpack.c.b16 %v483, %v479
      %v568 = vpack.c.b16 %v484, %v480
      %v569 = vpack.c.b16 %v485, %v481
      %v570 = vpack.c.b16 %v486, %v482
      %v571 = vpack.c.b16 %v491, %v487
      %v572 = vpack.c.b16 %v492, %v488
      %v573 = vpack.c.b16 %v493, %v489
      %v574 = vpack.c.b16 %v494, %v490
      %v575 = vpack.c.b16 %v499, %v495
      %v576 = vpack.c.b16 %v500, %v496
      %v577 = vpack.c.b16 %v501, %v497
      %v578 = vpack.c.b16 %v502, %v498
      %v579 = vpack.c.b16 %v507, %v503
      %v580 = vpack.c.b16 %v508, %v504
      %v581 = vpack.c.b16 %v509, %v505
      %v582 = vpack.c.b16 %v510, %v506
      %v583 = vpack.c.b16 %v515, %v511
      %v584 = vpack.c.b16 %v516, %v512
      %v585 = vpack.c.b16 %v517, %v513
      %v586 = vpack.c.b16 %v518, %v514
      %v587 = vpack.c.b16 %v523, %v519
      %v588 = vpack.c.b16 %v524, %v520
      %v589 = vpack.c.b16 %v525, %v521
      %v590 = vpack.c.b16 %v526, %v522
      %v719 = vunpack.c.l.b16 %v271
      %v720 = vunpack.c.l.b16 %v272
      %v721 = vunpack.c.l.b16 %v273
      %v722 = vunpack.c.l.b16 %v274
      %v723 = vunpack.c.l.b16 %v275
      %v724 = vunpack.c.l.b16 %v276
      %v725 = vunpack.c.l.b16 %v277
      %v726 = vunpack.c.l.b16 %v278
      %v727 = vunpack.c.l.b16 %v279
      %v728 = vunpack.c.l.b16 %v280
      %v729 = vunpack.c.l.b16 %v281
      %v730 = vunpack.c.l.b16 %v282
      %v731 = vunpack.c.l.b16 %v283
      %v732 = vunpack.c.l.b16 %v284
      %v733 = vunpack.c.l.b16 %v285
      %v734 = vunpack.c.l.b16 %v286
      %v735 = vunpack.c.l.b16 %v287
      %v736 = vunpack.c.l.b16 %v288
      %v737 = vunpack.c.l.b16 %v289
      %v738 = vunpack.c.l.b16 %v290
      %v739 = vunpack.c.l.b16 %v291
      %v740 = vunpack.c.l.b16 %v292
      %v741 = vunpack.c.l.b16 %v293
      %v742 = vunpack.c.l.b16 %v294
      %v743 = vunpack.c.l.b16 %v295
      %v744 = vunpack.c.l.b16 %v296
      %v745 = vunpack.c.l.b16 %v297
      %v746 = vunpack.c.l.b16 %v298
      %v747 = vunpack.c.l.b16 %v299
      %v748 = vunpack.c.l.b16 %v300
      %v749 = vunpack.c.l.b16 %v301
      %v750 = vunpack.c.l.b16 %v302
      %v751 = vunpack.c.l.b16 %v303
      %v752 = vunpack.c.l.b16 %v304
      %v753 = vunpack.c.l.b16 %v305
      %v754 = vunpack.c.l.b16 %v306
      %v755 = vunpack.c.l.b16 %v307
      %v756 = vunpack.c.l.b16 %v308
      %v757 = vunpack.c.l.b16 %v309
      %v758 = vunpack.c.l.b16 %v310
      %v759 = vunpack.c.l.b16 %v311
      %v760 = vunpack.c.l.b16 %v312
      %v761 = vunpack.c.l.b16 %v313
      %v762 = vunpack.c.l.b16 %v314
      %v763 = vunpack.c.l.b16 %v315
      %v764 = vunpack.c.l.b16 %v316
      %v765 = vunpack.c.l.b16 %v317
      %v766 = vunpack.c.l.b16 %v318
      %v767 = vunpack.c.l.b16 %v319
      %v768 = vunpack.c.l.b16 %v320
      %v769 = vunpack.c.l.b16 %v321
      %v770 = vunpack.c.l.b16 %v322
      %v771 = vunpack.c.l.b16 %v323
      %v772 = vunpack.c.l.b16 %v324
      %v773 = vunpack.c.l.b16 %v325
      %v774 = vunpack.c.l.b16 %v326
      %v775 = vunpack.c.l.b16 %v327
      %v776 = vunpack.c.l.b16 %v328
      %v777 = vunpack.c.l.b16 %v329
      %v778 = vunpack.c.l.b16 %v330
      %v779 = vunpack.c.l.b16 %v331
      %v780 = vunpack.c.l.b16 %v332
      %v781 = vunpack.c.l.b16 %v333
      %v782 = vunpack.c.l.b16 %v334
      %v783 = vpack.c.b16 %v720, %v719
      %v784 = vpack.c.b16 %v722, %v721
      %v785 = vpack.c.b16 %v724, %v723
      %v786 = vpack.c.b16 %v726, %v725
      %v787 = vpack.c.b16 %v728, %v727
      %v788 = vpack.c.b16 %v730, %v729
      %v789 = vpack.c.b16 %v732, %v731
      %v790 = vpack.c.b16 %v734, %v733
      %v791 = vpack.c.b16 %v736, %v735
      %v792 = vpack.c.b16 %v738, %v737
      %v793 = vpack.c.b16 %v740, %v739
      %v794 = vpack.c.b16 %v742, %v741
      %v795 = vpack.c.b16 %v744, %v743
      %v796 = vpack.c.b16 %v746, %v745
      %v797 = vpack.c.b16 %v748, %v747
      %v798 = vpack.c.b16 %v750, %v749
      %v799 = vpack.c.b16 %v752, %v751
      %v800 = vpack.c.b16 %v754, %v753
      %v801 = vpack.c.b16 %v756, %v755
      %v802 = vpack.c.b16 %v758, %v757
      %v803 = vpack.c.b16 %v760, %v759
      %v804 = vpack.c.b16 %v762, %v761
      %v805 = vpack.c.b16 %v764, %v763
      %v806 = vpack.c.b16 %v766, %v765
      %v807 = vpack.c.b16 %v768, %v767
      %v808 = vpack.c.b16 %v770, %v769
      %v809 = vpack.c.b16 %v772, %v771
      %v810 = vpack.c.b16 %v774, %v773
      %v811 = vpack.c.b16 %v776, %v775
      %v812 = vpack.c.b16 %v778, %v777
      %v813 = vpack.c.b16 %v780, %v779
      %v814 = vpack.c.b16 %v782, %v781
      %847 = vmatprep.subr.bf16.mxu0 0
      %848 = vmatpush1.bf16.msra.mxu0 %v790
      %849 = vmatprep.subr.bf16.mxu0 0
      %850 = vmatpush1.bf16.msra.mxu0 %v789
      %851 = vmatprep.subr.bf16.mxu0 0
      %852 = vmatpush1.bf16.msra.mxu0 %v788
      %853 = vmatprep.subr.bf16.mxu0 0
      %854 = vmatpush1.bf16.msra.mxu0 %v787
      %855 = vmatprep.subr.bf16.mxu0 0
      %856 = vmatpush1.bf16.msra.mxu0 %v786
      %857 = vmatprep.subr.bf16.mxu0 0
      %858 = vmatpush1.bf16.msra.mxu0 %v785
      %859 = vmatprep.subr.bf16.mxu0 0
      %860 = vmatpush1.bf16.msra.mxu0 %v784
      %861 = vmatprep.subr.bf16.mxu0 0
      %862 = vmatpush1.bf16.msra.mxu0 %v783
      %863 = vmatprep.subr.bf16.mxu0 0
      %864 = vmatpush2.bf16.msra.mxu0 %v798
      %865 = vmatprep.subr.bf16.mxu0 0
      %866 = vmatpush2.bf16.msra.mxu0 %v797
      %867 = vmatprep.subr.bf16.mxu0 0
      %868 = vmatpush2.bf16.msra.mxu0 %v796
      %869 = vmatprep.subr.bf16.mxu0 0
      %870 = vmatpush2.bf16.msra.mxu0 %v795
      %871 = vmatprep.subr.bf16.mxu0 0
      %872 = vmatpush2.bf16.msra.mxu0 %v794
      %873 = vmatprep.subr.bf16.mxu0 0
      %874 = vmatpush2.bf16.msra.mxu0 %v793
      %875 = vmatprep.subr.bf16.mxu0 0
      %876 = vmatpush2.bf16.msra.mxu0 %v792
      %877 = vmatprep.subr.bf16.mxu0 0
      %878 = vmatpush2.bf16.msra.mxu0 %v791
      %879 = vmatprep.mubr.bf16.mxu0 %v528
      %880 = vmatmul.mubr.bf16.gmra.mxu0 %v527
      %v881 = vpop.f32.mrf.mxu0
      %v882 = vadd.f32 0.0, %v881
      %v883 = vpop.f32.mrf.mxu0
      %v884 = vpop.f32.mrf.mxu0
      %v885 = vadd.f32 0.0, %v884
      %v886 = vpop.f32.mrf.mxu0
      %887 = vmatprep.mubr.bf16.mxu0 %v532
      %888 = vmatmul.mubr.bf16.gmra.mxu0 %v531
      %v889 = vpop.f32.mrf.mxu0
      %v890 = vadd.f32 0.0, %v889
      %v891 = vpop.f32.mrf.mxu0
      %v892 = vpop.f32.mrf.mxu0
      %v893 = vadd.f32 0.0, %v892
      %v894 = vpop.f32.mrf.mxu0
      %895 = vmatprep.mubr.bf16.mxu0 %v536
      %896 = vmatmul.mubr.bf16.gmra.mxu0 %v535
      %v897 = vpop.f32.mrf.mxu0
      %v898 = vadd.f32 0.0, %v897
      %v899 = vpop.f32.mrf.mxu0
      %v900 = vpop.f32.mrf.mxu0
      %v901 = vadd.f32 0.0, %v900
      %v902 = vpop.f32.mrf.mxu0
      %903 = vmatprep.mubr.bf16.mxu0 %v540
      %904 = vmatmul.mubr.bf16.gmra.mxu0 %v539
      %v905 = vpop.f32.mrf.mxu0
      %v906 = vadd.f32 0.0, %v905
      %v907 = vpop.f32.mrf.mxu0
      %v908 = vpop.f32.mrf.mxu0
      %v909 = vadd.f32 0.0, %v908
      %v910 = vpop.f32.mrf.mxu0
      %911 = vmatprep.mubr.bf16.mxu0 %v544
      %912 = vmatmul.mubr.bf16.gmra.mxu0 %v543
      %v913 = vpop.f32.mrf.mxu0
      %v914 = vadd.f32 0.0, %v913
      %v915 = vpop.f32.mrf.mxu0
      %v916 = vpop.f32.mrf.mxu0
      %v917 = vadd.f32 0.0, %v916
      %v918 = vpop.f32.mrf.mxu0
      %919 = vmatprep.mubr.bf16.mxu0 %v548
      %920 = vmatmul.mubr.bf16.gmra.mxu0 %v547
      %v921 = vpop.f32.mrf.mxu0
      %v922 = vadd.f32 0.0, %v921
      %v923 = vpop.f32.mrf.mxu0
      %v924 = vpop.f32.mrf.mxu0
      %v925 = vadd.f32 0.0, %v924
      %v926 = vpop.f32.mrf.mxu0
      %927 = vmatprep.mubr.bf16.mxu0 %v552
      %928 = vmatmul.mubr.bf16.gmra.mxu0 %v551
      %v929 = vpop.f32.mrf.mxu0
      %v930 = vadd.f32 0.0, %v929
      %v931 = vpop.f32.mrf.mxu0
      %v932 = vpop.f32.mrf.mxu0
      %v933 = vadd.f32 0.0, %v932
      %v934 = vpop.f32.mrf.mxu0
      %935 = vmatprep.mubr.bf16.mxu0 %v556
      %936 = vmatmul.mubr.bf16.gmra.mxu0 %v555
      %v937 = vpop.f32.mrf.mxu0
      %v938 = vadd.f32 0.0, %v937
      %v939 = vpop.f32.mrf.mxu0
      %v940 = vpop.f32.mrf.mxu0
      %v941 = vadd.f32 0.0, %v940
      %v942 = vpop.f32.mrf.mxu0
      %943 = vmatprep.mubr.bf16.mxu0 %v560
      %944 = vmatmul.mubr.bf16.gmra.mxu0 %v559
      %v945 = vpop.f32.mrf.mxu0
      %v946 = vadd.f32 0.0, %v945
      %v947 = vpop.f32.mrf.mxu0
      %v948 = vpop.f32.mrf.mxu0
      %v949 = vadd.f32 0.0, %v948
      %v950 = vpop.f32.mrf.mxu0
      %951 = vmatprep.mubr.bf16.mxu0 %v564
      %952 = vmatmul.mubr.bf16.gmra.mxu0 %v563
      %v953 = vpop.f32.mrf.mxu0
      %v954 = vadd.f32 0.0, %v953
      %v955 = vpop.f32.mrf.mxu0
      %v956 = vpop.f32.mrf.mxu0
      %v957 = vadd.f32 0.0, %v956
      %v958 = vpop.f32.mrf.mxu0
      %959 = vmatprep.mubr.bf16.mxu0 %v568
      %960 = vmatmul.mubr.bf16.gmra.mxu0 %v567
      %v961 = vpop.f32.mrf.mxu0
      %v962 = vadd.f32 0.0, %v961
      %v963 = vpop.f32.mrf.mxu0
      %v964 = vpop.f32.mrf.mxu0
      %v965 = vadd.f32 0.0, %v964
      %v966 = vpop.f32.mrf.mxu0
      %967 = vmatprep.mubr.bf16.mxu0 %v572
      %968 = vmatmul.mubr.bf16.gmra.mxu0 %v571
      %v969 = vpop.f32.mrf.mxu0
      %v970 = vadd.f32 0.0, %v969
      %v971 = vpop.f32.mrf.mxu0
      %v972 = vpop.f32.mrf.mxu0
      %v973 = vadd.f32 0.0, %v972
      %v974 = vpop.f32.mrf.mxu0
      %975 = vmatprep.mubr.bf16.mxu0 %v576
      %976 = vmatmul.mubr.bf16.gmra.mxu0 %v575
      %v977 = vpop.f32.mrf.mxu0
      %v978 = vadd.f32 0.0, %v977
      %v979 = vpop.f32.mrf.mxu0
      %v980 = vpop.f32.mrf.mxu0
      %v981 = vadd.f32 0.0, %v980
      %v982 = vpop.f32.mrf.mxu0
      %983 = vmatprep.mubr.bf16.mxu0 %v580
      %984 = vmatmul.mubr.bf16.gmra.mxu0 %v579
      %v985 = vpop.f32.mrf.mxu0
      %v986 = vadd.f32 0.0, %v985
      %v987 = vpop.f32.mrf.mxu0
      %v988 = vpop.f32.mrf.mxu0
      %v989 = vadd.f32 0.0, %v988
      %v990 = vpop.f32.mrf.mxu0
      %991 = vmatprep.mubr.bf16.mxu0 %v584
      %992 = vmatmul.mubr.bf16.gmra.mxu0 %v583
      %v993 = vpop.f32.mrf.mxu0
      %v994 = vadd.f32 0.0, %v993
      %v995 = vpop.f32.mrf.mxu0
      %v996 = vpop.f32.mrf.mxu0
      %v997 = vadd.f32 0.0, %v996
      %v998 = vpop.f32.mrf.mxu0
      %999 = vmatprep.mubr.bf16.mxu0 %v588
      %1000 = vmatmul.mubr.bf16.gmra.mxu0 %v587
      %v1001 = vpop.f32.mrf.mxu0
      %v1002 = vadd.f32 0.0, %v1001
      %v1003 = vpop.f32.mrf.mxu0
      %v1004 = vpop.f32.mrf.mxu0
      %v1005 = vadd.f32 0.0, %v1004
      %v1006 = vpop.f32.mrf.mxu0
      %1007 = vdwg.mxu0
      %1008 = vmatprep.subr.bf16.mxu0 0
      %1009 = vmatpush1.bf16.msra.mxu0 %v806
      %1010 = vmatprep.subr.bf16.mxu0 0
      %1011 = vmatpush1.bf16.msra.mxu0 %v805
      %1012 = vmatprep.subr.bf16.mxu0 0
      %1013 = vmatpush1.bf16.msra.mxu0 %v804
      %1014 = vmatprep.subr.bf16.mxu0 0
      %1015 = vmatpush1.bf16.msra.mxu0 %v803
      %1016 = vmatprep.subr.bf16.mxu0 0
      %1017 = vmatpush1.bf16.msra.mxu0 %v802
      %1018 = vmatprep.subr.bf16.mxu0 0
      %1019 = vmatpush1.bf16.msra.mxu0 %v801
      %1020 = vmatprep.subr.bf16.mxu0 0
      %1021 = vmatpush1.bf16.msra.mxu0 %v800
      %1022 = vmatprep.subr.bf16.mxu0 0
      %1023 = vmatpush1.bf16.msra.mxu0 %v799
      %1024 = vmatprep.subr.bf16.mxu0 0
      %1025 = vmatpush2.bf16.msra.mxu0 %v814
      %1026 = vmatprep.subr.bf16.mxu0 0
      %1027 = vmatpush2.bf16.msra.mxu0 %v813
      %1028 = vmatprep.subr.bf16.mxu0 0
      %1029 = vmatpush2.bf16.msra.mxu0 %v812
      %1030 = vmatprep.subr.bf16.mxu0 0
      %1031 = vmatpush2.bf16.msra.mxu0 %v811
      %1032 = vmatprep.subr.bf16.mxu0 0
      %1033 = vmatpush2.bf16.msra.mxu0 %v810
      %1034 = vmatprep.subr.bf16.mxu0 0
      %1035 = vmatpush2.bf16.msra.mxu0 %v809
      %1036 = vmatprep.subr.bf16.mxu0 0
      %1037 = vmatpush2.bf16.msra.mxu0 %v808
      %1038 = vmatprep.subr.bf16.mxu0 0
      %1039 = vmatpush2.bf16.msra.mxu0 %v807
      %1040 = vmatprep.mubr.bf16.mxu0 %v530
      %1041 = vmatmul.mubr.bf16.gmra.mxu0 %v529
      %v1042 = vpop.f32.mrf.mxu0
      %v1043 = vadd.f32 %v882, %v1042
      %v1044 = vpop.f32.mrf.mxu0
      %v1045 = vpop.f32.mrf.mxu0
      %v1046 = vadd.f32 %v885, %v1045
      %v1047 = vpop.f32.mrf.mxu0
      %1048 = vmatprep.mubr.bf16.mxu0 %v534
      %1049 = vmatmul.mubr.bf16.gmra.mxu0 %v533
      %v1050 = vpop.f32.mrf.mxu0
      %v1051 = vadd.f32 %v890, %v1050
      %v1052 = vpop.f32.mrf.mxu0
      %v1053 = vpop.f32.mrf.mxu0
      %v1054 = vadd.f32 %v893, %v1053
      %v1055 = vpop.f32.mrf.mxu0
      %1056 = vmatprep.mubr.bf16.mxu0 %v538
      %1057 = vmatmul.mubr.bf16.gmra.mxu0 %v537
      %v1058 = vpop.f32.mrf.mxu0
      %v1059 = vadd.f32 %v898, %v1058
      %v1060 = vpop.f32.mrf.mxu0
      %v1061 = vpop.f32.mrf.mxu0
      %v1062 = vadd.f32 %v901, %v1061
      %v1063 = vpop.f32.mrf.mxu0
      %1064 = vmatprep.mubr.bf16.mxu0 %v542
      %1065 = vmatmul.mubr.bf16.gmra.mxu0 %v541
      %v1066 = vpop.f32.mrf.mxu0
      %v1067 = vadd.f32 %v906, %v1066
      %v1068 = vpop.f32.mrf.mxu0
      %v1069 = vpop.f32.mrf.mxu0
      %v1070 = vadd.f32 %v909, %v1069
      %v1071 = vpop.f32.mrf.mxu0
      %1072 = vmatprep.mubr.bf16.mxu0 %v546
      %1073 = vmatmul.mubr.bf16.gmra.mxu0 %v545
      %v1074 = vpop.f32.mrf.mxu0
      %v1075 = vadd.f32 %v914, %v1074
      %v1076 = vpop.f32.mrf.mxu0
      %v1077 = vpop.f32.mrf.mxu0
      %v1078 = vadd.f32 %v917, %v1077
      %v1079 = vpop.f32.mrf.mxu0
      %1080 = vmatprep.mubr.bf16.mxu0 %v550
      %1081 = vmatmul.mubr.bf16.gmra.mxu0 %v549
      %v1082 = vpop.f32.mrf.mxu0
      %v1083 = vadd.f32 %v922, %v1082
      %v1084 = vpop.f32.mrf.mxu0
      %v1085 = vpop.f32.mrf.mxu0
      %v1086 = vadd.f32 %v925, %v1085
      %v1087 = vpop.f32.mrf.mxu0
      %1088 = vmatprep.mubr.bf16.mxu0 %v554
      %1089 = vmatmul.mubr.bf16.gmra.mxu0 %v553
      %v1090 = vpop.f32.mrf.mxu0
      %v1091 = vadd.f32 %v930, %v1090
      %v1092 = vpop.f32.mrf.mxu0
      %v1093 = vpop.f32.mrf.mxu0
      %v1094 = vadd.f32 %v933, %v1093
      %v1095 = vpop.f32.mrf.mxu0
      %1096 = vmatprep.mubr.bf16.mxu0 %v558
      %1097 = vmatmul.mubr.bf16.gmra.mxu0 %v557
      %v1098 = vpop.f32.mrf.mxu0
      %v1099 = vadd.f32 %v938, %v1098
      %v1100 = vpop.f32.mrf.mxu0
      %v1101 = vpop.f32.mrf.mxu0
      %v1102 = vadd.f32 %v941, %v1101
      %v1103 = vpop.f32.mrf.mxu0
      %1104 = vmatprep.mubr.bf16.mxu0 %v562
      %1105 = vmatmul.mubr.bf16.gmra.mxu0 %v561
      %v1106 = vpop.f32.mrf.mxu0
      %v1107 = vadd.f32 %v946, %v1106
      %v1108 = vpop.f32.mrf.mxu0
      %v1109 = vpop.f32.mrf.mxu0
      %v1110 = vadd.f32 %v949, %v1109
      %v1111 = vpop.f32.mrf.mxu0
      %1112 = vmatprep.mubr.bf16.mxu0 %v566
      %1113 = vmatmul.mubr.bf16.gmra.mxu0 %v565
      %v1114 = vpop.f32.mrf.mxu0
      %v1115 = vadd.f32 %v954, %v1114
      %v1116 = vpop.f32.mrf.mxu0
      %v1117 = vpop.f32.mrf.mxu0
      %v1118 = vadd.f32 %v957, %v1117
      %v1119 = vpop.f32.mrf.mxu0
      %1120 = vmatprep.mubr.bf16.mxu0 %v570
      %1121 = vmatmul.mubr.bf16.gmra.mxu0 %v569
      %v1122 = vpop.f32.mrf.mxu0
      %v1123 = vadd.f32 %v962, %v1122
      %v1124 = vpop.f32.mrf.mxu0
      %v1125 = vpop.f32.mrf.mxu0
      %v1126 = vadd.f32 %v965, %v1125
      %v1127 = vpop.f32.mrf.mxu0
      %1128 = vmatprep.mubr.bf16.mxu0 %v574
      %1129 = vmatmul.mubr.bf16.gmra.mxu0 %v573
      %v1130 = vpop.f32.mrf.mxu0
      %v1131 = vadd.f32 %v970, %v1130
      %v1132 = vpop.f32.mrf.mxu0
      %v1133 = vpop.f32.mrf.mxu0
      %v1134 = vadd.f32 %v973, %v1133
      %v1135 = vpop.f32.mrf.mxu0
      %1136 = vmatprep.mubr.bf16.mxu0 %v578
      %1137 = vmatmul.mubr.bf16.gmra.mxu0 %v577
      %v1138 = vpop.f32.mrf.mxu0
      %v1139 = vadd.f32 %v978, %v1138
      %v1140 = vpop.f32.mrf.mxu0
      %v1141 = vpop.f32.mrf.mxu0
      %v1142 = vadd.f32 %v981, %v1141
      %v1143 = vpop.f32.mrf.mxu0
      %1144 = vmatprep.mubr.bf16.mxu0 %v582
      %1145 = vmatmul.mubr.bf16.gmra.mxu0 %v581
      %v1146 = vpop.f32.mrf.mxu0
      %v1147 = vadd.f32 %v986, %v1146
      %v1148 = vpop.f32.mrf.mxu0
      %v1149 = vpop.f32.mrf.mxu0
      %v1150 = vadd.f32 %v989, %v1149
      %v1151 = vpop.f32.mrf.mxu0
      %1152 = vmatprep.mubr.bf16.mxu0 %v586
      %1153 = vmatmul.mubr.bf16.gmra.mxu0 %v585
      %v1154 = vpop.f32.mrf.mxu0
      %v1155 = vadd.f32 %v994, %v1154
      %v1156 = vpop.f32.mrf.mxu0
      %v1157 = vpop.f32.mrf.mxu0
      %v1158 = vadd.f32 %v997, %v1157
      %v1159 = vpop.f32.mrf.mxu0
      %1160 = vmatprep.mubr.bf16.mxu0 %v590
      %1161 = vmatmul.mubr.bf16.gmra.mxu0 %v589
      %v1162 = vpop.f32.mrf.mxu0
      %v1163 = vadd.f32 %v1002, %v1162
      %v1164 = vpop.f32.mrf.mxu0
      %v1165 = vpop.f32.mrf.mxu0
      %v1166 = vadd.f32 %v1005, %v1165
      %v1167 = vpop.f32.mrf.mxu0
      %1168 = vdwg.mxu0
      %v1169 = vpack.c.bf16 %v1046, %v1043
      %v1170 = vpack.c.bf16 %v1054, %v1051
      %v1171 = vpack.c.bf16 %v1062, %v1059
      %v1172 = vpack.c.bf16 %v1070, %v1067
      %v1173 = vpack.c.bf16 %v1078, %v1075
      %v1174 = vpack.c.bf16 %v1086, %v1083
      %v1175 = vpack.c.bf16 %v1094, %v1091
      %v1176 = vpack.c.bf16 %v1102, %v1099
      %v1177 = vpack.c.bf16 %v1110, %v1107
      %v1178 = vpack.c.bf16 %v1118, %v1115
      %v1179 = vpack.c.bf16 %v1126, %v1123
      %v1180 = vpack.c.bf16 %v1134, %v1131
      %v1181 = vpack.c.bf16 %v1142, %v1139
      %v1182 = vpack.c.bf16 %v1150, %v1147
      %v1183 = vpack.c.bf16 %v1158, %v1155
      %v1184 = vpack.c.bf16 %v1166, %v1163
      %v1185 = vld [vmem:[%s2] sm:$0xff]
      %v1186 = vld [vmem:[%s2 + $0x8] sm:$0xff]
      %v1187 = vld [vmem:[%s2 + $0x10] sm:$0xff]
      %v1188 = vld [vmem:[%s2 + $0x18] sm:$0xff]
      %v1189 = vld [vmem:[%s2 + $0x20] sm:$0xff]
      %v1190 = vld [vmem:[%s2 + $0x28] sm:$0xff]
      %v1191 = vld [vmem:[%s2 + $0x30] sm:$0xff]
      %v1192 = vld [vmem:[%s2 + $0x38] sm:$0xff]
      %v1193 = vld [vmem:[%s2 + $0x40] sm:$0xff]
      %v1194 = vld [vmem:[%s2 + $0x48] sm:$0xff]
      %v1195 = vld [vmem:[%s2 + $0x50] sm:$0xff]
      %v1196 = vld [vmem:[%s2 + $0x58] sm:$0xff]
      %v1197 = vld [vmem:[%s2 + $0x60] sm:$0xff]
      %v1198 = vld [vmem:[%s2 + $0x68] sm:$0xff]
      %v1199 = vld [vmem:[%s2 + $0x70] sm:$0xff]
      %v1200 = vld [vmem:[%s2 + $0x78] sm:$0xff]
      %v1201 = vld [vmem:[%s3] sm:$0x3]
      %v1203 = vlaneseq
      %v1204 = vshrl.u32 %v1203, 7
      %v1205 = vsub.s32 0, %v1204
      %v1206 = vrot.slane %v1201, %v1205
      %v1207 = vlaneseq
      %v1208 = vshrl.u32 %v1207, 7
      %v1209 = vsub.s32 1, %v1208
      %v1210 = vrot.slane %v1201, %v1209
      %v1229 = vunpack.c.l.b16 %v1185
      %v1230 = vunpack.c.h.b16 %v1185
      %v1231 = vunpack.c.l.b16 %v1186
      %v1232 = vunpack.c.h.b16 %v1186
      %v1233 = vunpack.c.l.b16 %v1187
      %v1234 = vunpack.c.h.b16 %v1187
      %v1235 = vunpack.c.l.b16 %v1188
      %v1236 = vunpack.c.h.b16 %v1188
      %v1237 = vunpack.c.l.b16 %v1189
      %v1238 = vunpack.c.h.b16 %v1189
      %v1239 = vunpack.c.l.b16 %v1190
      %v1240 = vunpack.c.h.b16 %v1190
      %v1241 = vunpack.c.l.b16 %v1191
      %v1242 = vunpack.c.h.b16 %v1191
      %v1243 = vunpack.c.l.b16 %v1192
      %v1244 = vunpack.c.h.b16 %v1192
      %v1245 = vunpack.c.l.b16 %v1193
      %v1246 = vunpack.c.h.b16 %v1193
      %v1247 = vunpack.c.l.b16 %v1194
      %v1248 = vunpack.c.h.b16 %v1194
      %v1249 = vunpack.c.l.b16 %v1195
      %v1250 = vunpack.c.h.b16 %v1195
      %v1251 = vunpack.c.l.b16 %v1196
      %v1252 = vunpack.c.h.b16 %v1196
      %v1253 = vunpack.c.l.b16 %v1197
      %v1254 = vunpack.c.h.b16 %v1197
      %v1255 = vunpack.c.l.b16 %v1198
      %v1256 = vunpack.c.h.b16 %v1198
      %v1257 = vunpack.c.l.b16 %v1199
      %v1258 = vunpack.c.h.b16 %v1199
      %v1259 = vunpack.c.l.b16 %v1200
      %v1260 = vunpack.c.h.b16 %v1200
      %v1261 = vpack.c.b16 %v1231, %v1229
      %v1262 = vpack.c.b16 %v1232, %v1230
      %v1263 = vpack.c.b16 %v1235, %v1233
      %v1264 = vpack.c.b16 %v1236, %v1234
      %v1265 = vpack.c.b16 %v1239, %v1237
      %v1266 = vpack.c.b16 %v1240, %v1238
      %v1267 = vpack.c.b16 %v1243, %v1241
      %v1268 = vpack.c.b16 %v1244, %v1242
      %v1269 = vpack.c.b16 %v1247, %v1245
      %v1270 = vpack.c.b16 %v1248, %v1246
      %v1271 = vpack.c.b16 %v1251, %v1249
      %v1272 = vpack.c.b16 %v1252, %v1250
      %v1273 = vpack.c.b16 %v1255, %v1253
      %v1274 = vpack.c.b16 %v1256, %v1254
      %v1275 = vpack.c.b16 %v1259, %v1257
      %v1276 = vpack.c.b16 %v1260, %v1258
      %1293 = vmatprep.subr.bf16.mxu0 %v1276
      %1294 = vmatpush1.bf16.msra.mxu0 %v1275
      %1295 = vmatprep.subr.bf16.mxu0 %v1274
      %1296 = vmatpush1.bf16.msra.mxu0 %v1273
      %1297 = vmatprep.subr.bf16.mxu0 %v1272
      %1298 = vmatpush1.bf16.msra.mxu0 %v1271
      %1299 = vmatprep.subr.bf16.mxu0 %v1270
      %1300 = vmatpush1.bf16.msra.mxu0 %v1269
      %1301 = vmatprep.subr.bf16.mxu0 %v1268
      %1302 = vmatpush1.bf16.msra.mxu0 %v1267
      %1303 = vmatprep.subr.bf16.mxu0 %v1266
      %1304 = vmatpush1.bf16.msra.mxu0 %v1265
      %1305 = vmatprep.subr.bf16.mxu0 %v1264
      %1306 = vmatpush1.bf16.msra.mxu0 %v1263
      %1307 = vmatprep.subr.bf16.mxu0 %v1262
      %1308 = vmatpush1.bf16.msra.mxu0 %v1261
      %1309 = vmatprep.subr.bf16.mxu0 0
      %1310 = vmatpush2.bf16.msra.mxu0 0
      %1311 = vmatprep.subr.bf16.mxu0 0
      %1312 = vmatpush2.bf16.msra.mxu0 0
      %1313 = vmatprep.subr.bf16.mxu0 0
      %1314 = vmatpush2.bf16.msra.mxu0 0
      %1315 = vmatprep.subr.bf16.mxu0 0
      %1316 = vmatpush2.bf16.msra.mxu0 0
      %1317 = vmatprep.subr.bf16.mxu0 0
      %1318 = vmatpush2.bf16.msra.mxu0 0
      %1319 = vmatprep.subr.bf16.mxu0 0
      %1320 = vmatpush2.bf16.msra.mxu0 0
      %1321 = vmatprep.subr.bf16.mxu0 0
      %1322 = vmatpush2.bf16.msra.mxu0 0
      %1323 = vmatprep.subr.bf16.mxu0 0
      %1324 = vmatpush2.bf16.msra.mxu0 0
      %1325 = vmatprep.mubr.bf16.mxu0 0
      %1326 = vmatmul.mubr.bf16.gmra.mxu0 %v1169
      %v1327 = vpop.f32.mrf.mxu0
      %v1328 = vadd.f32 %v1206, %v1327
      %v1329 = vpop.f32.mrf.mxu0
      %v1330 = vadd.f32 %v1210, %v1329
      %v1331 = vpop.f32.mrf.mxu0
      %v1332 = vadd.f32 %v1206, %v1331
      %v1333 = vpop.f32.mrf.mxu0
      %v1334 = vadd.f32 %v1210, %v1333
      %1335 = vmatprep.mubr.bf16.mxu0 0
      %1336 = vmatmul.mubr.bf16.gmra.mxu0 %v1170
      %v1337 = vpop.f32.mrf.mxu0
      %v1338 = vadd.f32 %v1206, %v1337
      %v1339 = vpop.f32.mrf.mxu0
      %v1340 = vadd.f32 %v1210, %v1339
      %v1341 = vpop.f32.mrf.mxu0
      %v1342 = vadd.f32 %v1206, %v1341
      %v1343 = vpop.f32.mrf.mxu0
      %v1344 = vadd.f32 %v1210, %v1343
      %1345 = vmatprep.mubr.bf16.mxu0 0
      %1346 = vmatmul.mubr.bf16.gmra.mxu0 %v1171
      %v1347 = vpop.f32.mrf.mxu0
      %v1348 = vadd.f32 %v1206, %v1347
      %v1349 = vpop.f32.mrf.mxu0
      %v1350 = vadd.f32 %v1210, %v1349
      %v1351 = vpop.f32.mrf.mxu0
      %v1352 = vadd.f32 %v1206, %v1351
      %v1353 = vpop.f32.mrf.mxu0
      %v1354 = vadd.f32 %v1210, %v1353
      %1355 = vmatprep.mubr.bf16.mxu0 0
      %1356 = vmatmul.mubr.bf16.gmra.mxu0 %v1172
      %v1357 = vpop.f32.mrf.mxu0
      %v1358 = vadd.f32 %v1206, %v1357
      %v1359 = vpop.f32.mrf.mxu0
      %v1360 = vadd.f32 %v1210, %v1359
      %v1361 = vpop.f32.mrf.mxu0
      %v1362 = vadd.f32 %v1206, %v1361
      %v1363 = vpop.f32.mrf.mxu0
      %v1364 = vadd.f32 %v1210, %v1363
      %1365 = vmatprep.mubr.bf16.mxu0 0
      %1366 = vmatmul.mubr.bf16.gmra.mxu0 %v1173
      %v1367 = vpop.f32.mrf.mxu0
      %v1368 = vadd.f32 %v1206, %v1367
      %v1369 = vpop.f32.mrf.mxu0
      %v1370 = vadd.f32 %v1210, %v1369
      %v1371 = vpop.f32.mrf.mxu0
      %v1372 = vadd.f32 %v1206, %v1371
      %v1373 = vpop.f32.mrf.mxu0
      %v1374 = vadd.f32 %v1210, %v1373
      %1375 = vmatprep.mubr.bf16.mxu0 0
      %1376 = vmatmul.mubr.bf16.gmra.mxu0 %v1174
      %v1377 = vpop.f32.mrf.mxu0
      %v1378 = vadd.f32 %v1206, %v1377
      %v1379 = vpop.f32.mrf.mxu0
      %v1380 = vadd.f32 %v1210, %v1379
      %v1381 = vpop.f32.mrf.mxu0
      %v1382 = vadd.f32 %v1206, %v1381
      %v1383 = vpop.f32.mrf.mxu0
      %v1384 = vadd.f32 %v1210, %v1383
      %1385 = vmatprep.mubr.bf16.mxu0 0
      %1386 = vmatmul.mubr.bf16.gmra.mxu0 %v1175
      %v1387 = vpop.f32.mrf.mxu0
      %v1388 = vadd.f32 %v1206, %v1387
      %v1389 = vpop.f32.mrf.mxu0
      %v1390 = vadd.f32 %v1210, %v1389
      %v1391 = vpop.f32.mrf.mxu0
      %v1392 = vadd.f32 %v1206, %v1391
      %v1393 = vpop.f32.mrf.mxu0
      %v1394 = vadd.f32 %v1210, %v1393
      %1395 = vmatprep.mubr.bf16.mxu0 0
      %1396 = vmatmul.mubr.bf16.gmra.mxu0 %v1176
      %v1397 = vpop.f32.mrf.mxu0
      %v1398 = vadd.f32 %v1206, %v1397
      %v1399 = vpop.f32.mrf.mxu0
      %v1400 = vadd.f32 %v1210, %v1399
      %v1401 = vpop.f32.mrf.mxu0
      %v1402 = vadd.f32 %v1206, %v1401
      %v1403 = vpop.f32.mrf.mxu0
      %v1404 = vadd.f32 %v1210, %v1403
      %1405 = vmatprep.mubr.bf16.mxu0 0
      %1406 = vmatmul.mubr.bf16.gmra.mxu0 %v1177
      %v1407 = vpop.f32.mrf.mxu0
      %v1408 = vadd.f32 %v1206, %v1407
      %v1409 = vpop.f32.mrf.mxu0
      %v1410 = vadd.f32 %v1210, %v1409
      %v1411 = vpop.f32.mrf.mxu0
      %v1412 = vadd.f32 %v1206, %v1411
      %v1413 = vpop.f32.mrf.mxu0
      %v1414 = vadd.f32 %v1210, %v1413
      %1415 = vmatprep.mubr.bf16.mxu0 0
      %1416 = vmatmul.mubr.bf16.gmra.mxu0 %v1178
      %v1417 = vpop.f32.mrf.mxu0
      %v1418 = vadd.f32 %v1206, %v1417
      %v1419 = vpop.f32.mrf.mxu0
      %v1420 = vadd.f32 %v1210, %v1419
      %v1421 = vpop.f32.mrf.mxu0
      %v1422 = vadd.f32 %v1206, %v1421
      %v1423 = vpop.f32.mrf.mxu0
      %v1424 = vadd.f32 %v1210, %v1423
      %1425 = vmatprep.mubr.bf16.mxu0 0
      %1426 = vmatmul.mubr.bf16.gmra.mxu0 %v1179
      %v1427 = vpop.f32.mrf.mxu0
      %v1428 = vadd.f32 %v1206, %v1427
      %v1429 = vpop.f32.mrf.mxu0
      %v1430 = vadd.f32 %v1210, %v1429
      %v1431 = vpop.f32.mrf.mxu0
      %v1432 = vadd.f32 %v1206, %v1431
      %v1433 = vpop.f32.mrf.mxu0
      %v1434 = vadd.f32 %v1210, %v1433
      %1435 = vmatprep.mubr.bf16.mxu0 0
      %1436 = vmatmul.mubr.bf16.gmra.mxu0 %v1180
      %v1437 = vpop.f32.mrf.mxu0
      %v1438 = vadd.f32 %v1206, %v1437
      %v1439 = vpop.f32.mrf.mxu0
      %v1440 = vadd.f32 %v1210, %v1439
      %v1441 = vpop.f32.mrf.mxu0
      %v1442 = vadd.f32 %v1206, %v1441
      %v1443 = vpop.f32.mrf.mxu0
      %v1444 = vadd.f32 %v1210, %v1443
      %1445 = vmatprep.mubr.bf16.mxu0 0
      %1446 = vmatmul.mubr.bf16.gmra.mxu0 %v1181
      %v1447 = vpop.f32.mrf.mxu0
      %v1448 = vadd.f32 %v1206, %v1447
      %v1449 = vpop.f32.mrf.mxu0
      %v1450 = vadd.f32 %v1210, %v1449
      %v1451 = vpop.f32.mrf.mxu0
      %v1452 = vadd.f32 %v1206, %v1451
      %v1453 = vpop.f32.mrf.mxu0
      %v1454 = vadd.f32 %v1210, %v1453
      %1455 = vmatprep.mubr.bf16.mxu0 0
      %1456 = vmatmul.mubr.bf16.gmra.mxu0 %v1182
      %v1457 = vpop.f32.mrf.mxu0
      %v1458 = vadd.f32 %v1206, %v1457
      %v1459 = vpop.f32.mrf.mxu0
      %v1460 = vadd.f32 %v1210, %v1459
      %v1461 = vpop.f32.mrf.mxu0
      %v1462 = vadd.f32 %v1206, %v1461
      %v1463 = vpop.f32.mrf.mxu0
      %v1464 = vadd.f32 %v1210, %v1463
      %1465 = vmatprep.mubr.bf16.mxu0 0
      %1466 = vmatmul.mubr.bf16.gmra.mxu0 %v1183
      %v1467 = vpop.f32.mrf.mxu0
      %v1468 = vadd.f32 %v1206, %v1467
      %v1469 = vpop.f32.mrf.mxu0
      %v1470 = vadd.f32 %v1210, %v1469
      %v1471 = vpop.f32.mrf.mxu0
      %v1472 = vadd.f32 %v1206, %v1471
      %v1473 = vpop.f32.mrf.mxu0
      %v1474 = vadd.f32 %v1210, %v1473
      %1475 = vmatprep.mubr.bf16.mxu0 0
      %1476 = vmatmul.mubr.bf16.gmra.mxu0 %v1184
      %v1477 = vpop.f32.mrf.mxu0
      %v1478 = vadd.f32 %v1206, %v1477
      %v1479 = vpop.f32.mrf.mxu0
      %v1480 = vadd.f32 %v1210, %v1479
      %v1481 = vpop.f32.mrf.mxu0
      %v1482 = vadd.f32 %v1206, %v1481
      %v1483 = vpop.f32.mrf.mxu0
      %v1484 = vadd.f32 %v1210, %v1483
      %1485 = vdwg.mxu0
      %v1486 = vmax.f32 %v1328, 0.0
      %v1487 = vmax.f32 %v1330, 0.0
      %v1488 = vmax.f32 %v1332, 0.0
      %v1489 = vmax.f32 %v1334, 0.0
      %v1490 = vmax.f32 %v1338, 0.0
      %v1491 = vmax.f32 %v1340, 0.0
      %v1492 = vmax.f32 %v1342, 0.0
      %v1493 = vmax.f32 %v1344, 0.0
      %v1494 = vmax.f32 %v1348, 0.0
      %v1495 = vmax.f32 %v1350, 0.0
      %v1496 = vmax.f32 %v1352, 0.0
      %v1497 = vmax.f32 %v1354, 0.0
      %v1498 = vmax.f32 %v1358, 0.0
      %v1499 = vmax.f32 %v1360, 0.0
      %v1500 = vmax.f32 %v1362, 0.0
      %v1501 = vmax.f32 %v1364, 0.0
      %v1502 = vmax.f32 %v1368, 0.0
      %v1503 = vmax.f32 %v1370, 0.0
      %v1504 = vmax.f32 %v1372, 0.0
      %v1505 = vmax.f32 %v1374, 0.0
      %v1506 = vmax.f32 %v1378, 0.0
      %v1507 = vmax.f32 %v1380, 0.0
      %v1508 = vmax.f32 %v1382, 0.0
      %v1509 = vmax.f32 %v1384, 0.0
      %v1510 = vmax.f32 %v1388, 0.0
      %v1511 = vmax.f32 %v1390, 0.0
      %v1512 = vmax.f32 %v1392, 0.0
      %v1513 = vmax.f32 %v1394, 0.0
      %v1514 = vmax.f32 %v1398, 0.0
      %v1515 = vmax.f32 %v1400, 0.0
      %v1516 = vmax.f32 %v1402, 0.0
      %v1517 = vmax.f32 %v1404, 0.0
      %v1518 = vmax.f32 %v1408, 0.0
      %v1519 = vmax.f32 %v1410, 0.0
      %v1520 = vmax.f32 %v1412, 0.0
      %v1521 = vmax.f32 %v1414, 0.0
      %v1522 = vmax.f32 %v1418, 0.0
      %v1523 = vmax.f32 %v1420, 0.0
      %v1524 = vmax.f32 %v1422, 0.0
      %v1525 = vmax.f32 %v1424, 0.0
      %v1526 = vmax.f32 %v1428, 0.0
      %v1527 = vmax.f32 %v1430, 0.0
      %v1528 = vmax.f32 %v1432, 0.0
      %v1529 = vmax.f32 %v1434, 0.0
      %v1530 = vmax.f32 %v1438, 0.0
      %v1531 = vmax.f32 %v1440, 0.0
      %v1532 = vmax.f32 %v1442, 0.0
      %v1533 = vmax.f32 %v1444, 0.0
      %v1534 = vmax.f32 %v1448, 0.0
      %v1535 = vmax.f32 %v1450, 0.0
      %v1536 = vmax.f32 %v1452, 0.0
      %v1537 = vmax.f32 %v1454, 0.0
      %v1538 = vmax.f32 %v1458, 0.0
      %v1539 = vmax.f32 %v1460, 0.0
      %v1540 = vmax.f32 %v1462, 0.0
      %v1541 = vmax.f32 %v1464, 0.0
      %v1542 = vmax.f32 %v1468, 0.0
      %v1543 = vmax.f32 %v1470, 0.0
      %v1544 = vmax.f32 %v1472, 0.0
      %v1545 = vmax.f32 %v1474, 0.0
      %v1546 = vmax.f32 %v1478, 0.0
      %v1547 = vmax.f32 %v1480, 0.0
      %v1548 = vmax.f32 %v1482, 0.0
      %v1549 = vmax.f32 %v1484, 0.0
      %v1550 = vpack.c.bf16 %v1488, %v1486
      %v1551 = vpack.c.bf16 %v1489, %v1487
      %v1552 = vpack.c.bf16 %v1492, %v1490
      %v1553 = vpack.c.bf16 %v1493, %v1491
      %v1554 = vpack.c.bf16 %v1496, %v1494
      %v1555 = vpack.c.bf16 %v1497, %v1495
      %v1556 = vpack.c.bf16 %v1500, %v1498
      %v1557 = vpack.c.bf16 %v1501, %v1499
      %v1558 = vpack.c.bf16 %v1504, %v1502
      %v1559 = vpack.c.bf16 %v1505, %v1503
      %v1560 = vpack.c.bf16 %v1508, %v1506
      %v1561 = vpack.c.bf16 %v1509, %v1507
      %v1562 = vpack.c.bf16 %v1512, %v1510
      %v1563 = vpack.c.bf16 %v1513, %v1511
      %v1564 = vpack.c.bf16 %v1516, %v1514
      %v1565 = vpack.c.bf16 %v1517, %v1515
      %v1566 = vpack.c.bf16 %v1520, %v1518
      %v1567 = vpack.c.bf16 %v1521, %v1519
      %v1568 = vpack.c.bf16 %v1524, %v1522
      %v1569 = vpack.c.bf16 %v1525, %v1523
      %v1570 = vpack.c.bf16 %v1528, %v1526
      %v1571 = vpack.c.bf16 %v1529, %v1527
      %v1572 = vpack.c.bf16 %v1532, %v1530
      %v1573 = vpack.c.bf16 %v1533, %v1531
      %v1574 = vpack.c.bf16 %v1536, %v1534
      %v1575 = vpack.c.bf16 %v1537, %v1535
      %v1576 = vpack.c.bf16 %v1540, %v1538
      %v1577 = vpack.c.bf16 %v1541, %v1539
      %v1578 = vpack.c.bf16 %v1544, %v1542
      %v1579 = vpack.c.bf16 %v1545, %v1543
      %v1580 = vpack.c.bf16 %v1548, %v1546
      %v1581 = vpack.c.bf16 %v1549, %v1547
      %v1614 = vunpack.c.l.b16 %v1550
      %v1615 = vunpack.c.l.b16 %v1551
      %v1616 = vunpack.c.h.b16 %v1550
      %v1617 = vunpack.c.h.b16 %v1551
      %v1618 = vunpack.c.l.b16 %v1552
      %v1619 = vunpack.c.l.b16 %v1553
      %v1620 = vunpack.c.h.b16 %v1552
      %v1621 = vunpack.c.h.b16 %v1553
      %v1622 = vunpack.c.l.b16 %v1554
      %v1623 = vunpack.c.l.b16 %v1555
      %v1624 = vunpack.c.h.b16 %v1554
      %v1625 = vunpack.c.h.b16 %v1555
      %v1626 = vunpack.c.l.b16 %v1556
      %v1627 = vunpack.c.l.b16 %v1557
      %v1628 = vunpack.c.h.b16 %v1556
      %v1629 = vunpack.c.h.b16 %v1557
      %v1630 = vunpack.c.l.b16 %v1558
      %v1631 = vunpack.c.l.b16 %v1559
      %v1632 = vunpack.c.h.b16 %v1558
      %v1633 = vunpack.c.h.b16 %v1559
      %v1634 = vunpack.c.l.b16 %v1560
      %v1635 = vunpack.c.l.b16 %v1561
      %v1636 = vunpack.c.h.b16 %v1560
      %v1637 = vunpack.c.h.b16 %v1561
      %v1638 = vunpack.c.l.b16 %v1562
      %v1639 = vunpack.c.l.b16 %v1563
      %v1640 = vunpack.c.h.b16 %v1562
      %v1641 = vunpack.c.h.b16 %v1563
      %v1642 = vunpack.c.l.b16 %v1564
      %v1643 = vunpack.c.l.b16 %v1565
      %v1644 = vunpack.c.h.b16 %v1564
      %v1645 = vunpack.c.h.b16 %v1565
      %v1646 = vunpack.c.l.b16 %v1566
      %v1647 = vunpack.c.l.b16 %v1567
      %v1648 = vunpack.c.h.b16 %v1566
      %v1649 = vunpack.c.h.b16 %v1567
      %v1650 = vunpack.c.l.b16 %v1568
      %v1651 = vunpack.c.l.b16 %v1569
      %v1652 = vunpack.c.h.b16 %v1568
      %v1653 = vunpack.c.h.b16 %v1569
      %v1654 = vunpack.c.l.b16 %v1570
      %v1655 = vunpack.c.l.b16 %v1571
      %v1656 = vunpack.c.h.b16 %v1570
      %v1657 = vunpack.c.h.b16 %v1571
      %v1658 = vunpack.c.l.b16 %v1572
      %v1659 = vunpack.c.l.b16 %v1573
      %v1660 = vunpack.c.h.b16 %v1572
      %v1661 = vunpack.c.h.b16 %v1573
      %v1662 = vunpack.c.l.b16 %v1574
      %v1663 = vunpack.c.l.b16 %v1575
      %v1664 = vunpack.c.h.b16 %v1574
      %v1665 = vunpack.c.h.b16 %v1575
      %v1666 = vunpack.c.l.b16 %v1576
      %v1667 = vunpack.c.l.b16 %v1577
      %v1668 = vunpack.c.h.b16 %v1576
      %v1669 = vunpack.c.h.b16 %v1577
      %v1670 = vunpack.c.l.b16 %v1578
      %v1671 = vunpack.c.l.b16 %v1579
      %v1672 = vunpack.c.h.b16 %v1578
      %v1673 = vunpack.c.h.b16 %v1579
      %v1674 = vunpack.c.l.b16 %v1580
      %v1675 = vunpack.c.l.b16 %v1581
      %v1676 = vunpack.c.h.b16 %v1580
      %v1677 = vunpack.c.h.b16 %v1581
      %v1678 = vpack.c.b16 %v1615, %v1614
      %v1679 = vpack.c.b16 %v1617, %v1616
      %v1680 = vpack.c.b16 %v1619, %v1618
      %v1681 = vpack.c.b16 %v1621, %v1620
      %v1682 = vpack.c.b16 %v1623, %v1622
      %v1683 = vpack.c.b16 %v1625, %v1624
      %v1684 = vpack.c.b16 %v1627, %v1626
      %v1685 = vpack.c.b16 %v1629, %v1628
      %v1686 = vpack.c.b16 %v1631, %v1630
      %v1687 = vpack.c.b16 %v1633, %v1632
      %v1688 = vpack.c.b16 %v1635, %v1634
      %v1689 = vpack.c.b16 %v1637, %v1636
      %v1690 = vpack.c.b16 %v1639, %v1638
      %v1691 = vpack.c.b16 %v1641, %v1640
      %v1692 = vpack.c.b16 %v1643, %v1642
      %v1693 = vpack.c.b16 %v1645, %v1644
      %v1694 = vpack.c.b16 %v1647, %v1646
      %v1695 = vpack.c.b16 %v1649, %v1648
      %v1696 = vpack.c.b16 %v1651, %v1650
      %v1697 = vpack.c.b16 %v1653, %v1652
      %v1698 = vpack.c.b16 %v1655, %v1654
      %v1699 = vpack.c.b16 %v1657, %v1656
      %v1700 = vpack.c.b16 %v1659, %v1658
      %v1701 = vpack.c.b16 %v1661, %v1660
      %v1702 = vpack.c.b16 %v1663, %v1662
      %v1703 = vpack.c.b16 %v1665, %v1664
      %v1704 = vpack.c.b16 %v1667, %v1666
      %v1705 = vpack.c.b16 %v1669, %v1668
      %v1706 = vpack.c.b16 %v1671, %v1670
      %v1707 = vpack.c.b16 %v1673, %v1672
      %v1708 = vpack.c.b16 %v1675, %v1674
      %v1709 = vpack.c.b16 %v1677, %v1676
      %1742 = vst [vmem:[%s204] sm:$0xff] %v1678
      %1743 = vst [vmem:[%s204 + $0x8] sm:$0xff] %v1679
      %1744 = vst [vmem:[%s204 + $0x10] sm:$0xff] %v1680
      %1745 = vst [vmem:[%s204 + $0x18] sm:$0xff] %v1681
      %1746 = vst [vmem:[%s204 + $0x20] sm:$0xff] %v1682
      %1747 = vst [vmem:[%s204 + $0x28] sm:$0xff] %v1683
      %1748 = vst [vmem:[%s204 + $0x30] sm:$0xff] %v1684
      %1749 = vst [vmem:[%s204 + $0x38] sm:$0xff] %v1685
      %1750 = vst [vmem:[%s204 + $0x40] sm:$0xff] %v1686
      %1751 = vst [vmem:[%s204 + $0x48] sm:$0xff] %v1687
      %1752 = vst [vmem:[%s204 + $0x50] sm:$0xff] %v1688
      %1753 = vst [vmem:[%s204 + $0x58] sm:$0xff] %v1689
      %1754 = vst [vmem:[%s204 + $0x60] sm:$0xff] %v1690
      %1755 = vst [vmem:[%s204 + $0x68] sm:$0xff] %v1691
      %1756 = vst [vmem:[%s204 + $0x70] sm:$0xff] %v1692
      %1757 = vst [vmem:[%s204 + $0x78] sm:$0xff] %v1693
      %1758 = vst [vmem:[%s204 + $0x80] sm:$0xff] %v1694
      %1759 = vst [vmem:[%s204 + $0x88] sm:$0xff] %v1695
      %1760 = vst [vmem:[%s204 + $0x90] sm:$0xff] %v1696
      %1761 = vst [vmem:[%s204 + $0x98] sm:$0xff] %v1697
      %1762 = vst [vmem:[%s204 + $0xa0] sm:$0xff] %v1698
      %1763 = vst [vmem:[%s204 + $0xa8] sm:$0xff] %v1699
      %1764 = vst [vmem:[%s204 + $0xb0] sm:$0xff] %v1700
      %1765 = vst [vmem:[%s204 + $0xb8] sm:$0xff] %v1701
      %1766 = vst [vmem:[%s204 + $0xc0] sm:$0xff] %v1702
      %1767 = vst [vmem:[%s204 + $0xc8] sm:$0xff] %v1703
      %1768 = vst [vmem:[%s204 + $0xd0] sm:$0xff] %v1704
      %1769 = vst [vmem:[%s204 + $0xd8] sm:$0xff] %v1705
      %1770 = vst [vmem:[%s204 + $0xe0] sm:$0xff] %v1706
      %1771 = vst [vmem:[%s204 + $0xe8] sm:$0xff] %v1707
      %1772 = vst [vmem:[%s204 + $0xf0] sm:$0xff] %v1708
      %1773 = vst [vmem:[%s204 + $0xf8] sm:$0xff] %v1709
      %s1774 = smul.u32 32, %s15
      %p1775 = scmp.lt.s32.totalorder %s1774, 63
      %s1776 = scalar_select %p1775, %s1774, 63
      %s1777 = smul.addr %s1776, 2
      %s1778 = smul.addr %s1777, 4
      %s1779 = scalar_lea.vmem %s4, %s1778
      // Predicated region
      $region37: #{gcn_encoder_forward.2} parent=35 // pred_check
        %p1780 = pneg %p122
      $region38: #{gcn_encoder_forward.2} parent=35 // pred_check_branch
        %1782 = sbr.rel (%p1780) target = $region40
      $region39: #{gcn_encoder_forward.2} parent=35 // pred_region
        %s1783 = smul.u32 32, %s15
      $region40: #{gcn_encoder_forward.2} parent=35 // pred_fallthru
        _
    $region36: #{gcn_encoder_forward.2} parent=5 // pred_fallthru
      _
    %p1784 = scmp.le.s32.totalorder 2, %s10
    // Predicated region
    $region41: #{gcn_encoder_forward.2} parent=5 // pred_check
      %p1785 = pneg %p1784
    $region42: #{gcn_encoder_forward.2} parent=5 // pred_check_branch
      %1787 = sbr.rel (%p1785) target = $region44
    $region43: #{gcn_encoder_forward.2} parent=5 // pred_region
      %s1788 = ssub.s32 %s10, 2
      // Predicated region
      $region45: #{gcn_encoder_forward.2} parent=43 // pred_check
        %p1789 = pneg %p128
      $region46: #{gcn_encoder_forward.2} parent=43 // pred_check_branch
        %1791 = sbr.rel (%p1789) target = $region48
      $region47: #{gcn_encoder_forward.2} parent=43 // pred_region
        %s1792 = smul.u32 32, %s16
        %p1793 = scmp.lt.s32.totalorder %s1792, 63
        %s1794 = scalar_select %p1793, %s1792, 63
        %s1795 = smul.addr %s1794, 2
        %s1796 = smul.addr %s1795, 4
        %s1797 = scalar_lea.vmem %s4, %s1796
      $region48: #{gcn_encoder_forward.2} parent=43 // pred_fallthru
        _
    $region44: #{gcn_encoder_forward.2} parent=5 // pred_fallthru
      _
  $region6: #{gcn_encoder_forward.2} parent=0 // loop_footer
    %s14 = sadd.s32 1, %s10
  $region7: #{gcn_encoder_forward.2} parent=0 // loop_footer_branch
    %9 = sbr.rel target = $region3
  $region8: #{gcn_encoder_forward.2} parent=0 // loop_exit
    _

// kernel: gcn_encoder_forward.3
$region0: #{gcn_encoder_forward.3}
  #allocation0 [shape = 'u32[]', space=smem, size = 0x4, offset = 0x4, fixed_abs, tag = 'smem constant byte address 0x4 - core index']
  #allocation1 [shape = 'u32[144,128]{1,0:T(1,128)}', space=vmem, size = 0x12000, scoped, tag = 'internal scratch']
  %s0 = inlined_call_operand.vmem [shape: bf16[512,512], index: 0, kind: input, shape index: {}]
  %s1 = inlined_call_operand.vmem [shape: bf16[512,256], index: 1, kind: input, shape index: {}]
  %s2 = inlined_call_operand.vmem [shape: bf16[256,128], index: 2, kind: input, shape index: {}]
  %s3 = inlined_call_operand.vmem [shape: f32[1,128], index: 3, kind: input, shape index: {}]
  %s4 = inlined_call_operand.vmem [shape: f32[512,128], index: 4, kind: output, shape index: {}]
  %s5 = sld [smem:[#allocation0]]
  $region49: #{gcn_encoder_forward.3} parent=0
    _
  %s7 = ssub.s32 1, %s5
  %s8 = scalar_select 0, %s7, %s5
  loop: start=0, step=1, limit=4
  $region2: #{gcn_encoder_forward.3} parent=0 // loop_pre_header
    _
  $region3: #{gcn_encoder_forward.3} parent=0 // loop_header
    %s10 = sphi 0, %s14
    %p11 = scmp.ge.s32.totalorder %s10, 4
    %s20 = sphi 0, %s22
    %s23 = sphi 0, %s20
    %s24 = sphi 0, %s23
    %s40 = sphi 0, %s24
    %s44 = sphi 0, %s44
    %s46 = sphi 0, %s44
    %s47 = sphi 0, %s46
    %s61 = sphi 0, %s47
    %s65 = sphi 0, %s65
    %s67 = sphi 0, %s65
    %s68 = sphi 0, %s67
    %s82 = sphi 0, %s68
    %s86 = sphi 0, %s86
    %s88 = sphi 0, %s86
    %s89 = sphi 0, %s88
    %s103 = sphi 0, %s89
    %s109 = sphi 0, %s111
    %s112 = sphi 0, %s109
    %s113 = sphi 0, %s112
    %s129 = sphi 0, %s113
  $region4: #{gcn_encoder_forward.3} parent=0 // loop_header_branch
    %13 = sbr.rel (%p11) target = $region8
  $region5: #{gcn_encoder_forward.3} parent=0 // loop_body
    %s15 = ssub.s32 %s10, 1
    %s16 = ssub.s32 %s10, 2
    %s17 = sadd.s32 %s10, 1
    %s18 = ssub.s32 %s10, %s17
    %p19 = scmp.eq.s32.totalorder %s18, 0
    %s21 = sadd.s32 %s20, 1
    %s22 = scalar_select %p19, %s20, %s21
    %p25 = pneg %p19
    %p26 = scmp.eq.s32.totalorder %s10, 1
    %p27 = por %p25, %p26
    %p28 = scmp.ne.s32.totalorder %s20, %s23
    %p29 = scmp.eq.s32.totalorder %s10, 0
    %p30 = por %p28, %p29
    %p31 = scmp.ne.s32.totalorder %s20, %s23
    %p32 = scmp.eq.s32.totalorder %s15, 1
    %p33 = por %p31, %p32
    %p34 = scmp.ne.s32.totalorder %s23, %s24
    %p35 = scmp.eq.s32.totalorder %s15, 0
    %p36 = por %p34, %p35
    %p37 = scmp.ne.s32.totalorder %s23, %s24
    %p38 = scmp.eq.s32.totalorder %s16, 1
    %p39 = por %p37, %p38
    %p41 = scmp.ne.s32.totalorder %s24, %s40
    %p42 = scmp.eq.s32.totalorder %s16, 0
    %p43 = por %p41, %p42
    %s45 = sadd.s32 %s44, 1
    %p48 = scmp.eq.s32.totalorder %s10, 1
    %p49 = scmp.ne.s32.totalorder %s44, %s46
    %p50 = scmp.eq.s32.totalorder %s10, 0
    %p51 = por %p49, %p50
    %p52 = scmp.ne.s32.totalorder %s44, %s46
    %p53 = scmp.eq.s32.totalorder %s15, 1
    %p54 = por %p52, %p53
    %p55 = scmp.ne.s32.totalorder %s46, %s47
    %p56 = scmp.eq.s32.totalorder %s15, 0
    %p57 = por %p55, %p56
    %p58 = scmp.ne.s32.totalorder %s46, %s47
    %p59 = scmp.eq.s32.totalorder %s16, 1
    %p60 = por %p58, %p59
    %p62 = scmp.ne.s32.totalorder %s47, %s61
    %p63 = scmp.eq.s32.totalorder %s16, 0
    %p64 = por %p62, %p63
    %s66 = sadd.s32 %s65, 1
    %p69 = scmp.eq.s32.totalorder %s10, 1
    %p70 = scmp.ne.s32.totalorder %s65, %s67
    %p71 = scmp.eq.s32.totalorder %s10, 0
    %p72 = por %p70, %p71
    %p73 = scmp.ne.s32.totalorder %s65, %s67
    %p74 = scmp.eq.s32.totalorder %s15, 1
    %p75 = por %p73, %p74
    %p76 = scmp.ne.s32.totalorder %s67, %s68
    %p77 = scmp.eq.s32.totalorder %s15, 0
    %p78 = por %p76, %p77
    %p79 = scmp.ne.s32.totalorder %s67, %s68
    %p80 = scmp.eq.s32.totalorder %s16, 1
    %p81 = por %p79, %p80
    %p83 = scmp.ne.s32.totalorder %s68, %s82
    %p84 = scmp.eq.s32.totalorder %s16, 0
    %p85 = por %p83, %p84
    %s87 = sadd.s32 %s86, 1
    %p90 = scmp.eq.s32.totalorder %s10, 1
    %p91 = scmp.ne.s32.totalorder %s86, %s88
    %p92 = scmp.eq.s32.totalorder %s10, 0
    %p93 = por %p91, %p92
    %p94 = scmp.ne.s32.totalorder %s86, %s88
    %p95 = scmp.eq.s32.totalorder %s15, 1
    %p96 = por %p94, %p95
    %p97 = scmp.ne.s32.totalorder %s88, %s89
    %p98 = scmp.eq.s32.totalorder %s15, 0
    %p99 = por %p97, %p98
    %p100 = scmp.ne.s32.totalorder %s88, %s89
    %p101 = scmp.eq.s32.totalorder %s16, 1
    %p102 = por %p100, %p101
    %p104 = scmp.ne.s32.totalorder %s89, %s103
    %p105 = scmp.eq.s32.totalorder %s16, 0
    %p106 = por %p104, %p105
    %s107 = ssub.s32 %s10, %s17
    %p108 = scmp.eq.s32.totalorder %s107, 0
    %s110 = sadd.s32 %s109, 1
    %s111 = scalar_select %p108, %s109, %s110
    %p114 = pneg %p108
    %p115 = scmp.eq.s32.totalorder %s10, 1
    %p116 = por %p114, %p115
    %p117 = scmp.ne.s32.totalorder %s109, %s112
    %p118 = scmp.eq.s32.totalorder %s10, 0
    %p119 = por %p117, %p118
    %p120 = scmp.ne.s32.totalorder %s109, %s112
    %p121 = scmp.eq.s32.totalorder %s15, 1
    %p122 = por %p120, %p121
    %p123 = scmp.ne.s32.totalorder %s112, %s113
    %p124 = scmp.eq.s32.totalorder %s15, 0
    %p125 = por %p123, %p124
    %p126 = scmp.ne.s32.totalorder %s112, %s113
    %p127 = scmp.eq.s32.totalorder %s16, 1
    %p128 = por %p126, %p127
    %p130 = scmp.ne.s32.totalorder %s113, %s129
    %p131 = scmp.eq.s32.totalorder %s16, 0
    %p132 = por %p130, %p131
    %p133 = scmp.le.s32.totalorder 1, %s10
    %p134 = scmp.lt.s32.totalorder %s10, 3
    %p135 = pnand %p133, %p134
    %p136 = pneg %p135
    // Predicated region
    $region9: #{gcn_encoder_forward.3} parent=5 // pred_check
      _
    $region10: #{gcn_encoder_forward.3} parent=5 // pred_check_branch
      %138 = sbr.rel (%p135) target = $region12
    $region11: #{gcn_encoder_forward.3} parent=5 // pred_region
      %s139 = ssub.s32 %s10, 1
      // Predicated region
      $region13: #{gcn_encoder_forward.3} parent=11 // pred_check
        %p140 = pneg %p57
      $region14: #{gcn_encoder_forward.3} parent=11 // pred_check_branch
        %142 = sbr.rel (%p140) target = $region16
      $region15: #{gcn_encoder_forward.3} parent=11 // pred_region
        _
      $region16: #{gcn_encoder_forward.3} parent=11 // pred_fallthru
        _
      // Predicated region
      $region17: #{gcn_encoder_forward.3} parent=11 // pred_check
        %p143 = pneg %p78
      $region18: #{gcn_encoder_forward.3} parent=11 // pred_check_branch
        %145 = sbr.rel (%p143) target = $region20
      $region19: #{gcn_encoder_forward.3} parent=11 // pred_region
        _
      $region20: #{gcn_encoder_forward.3} parent=11 // pred_fallthru
        _
      // Predicated region
      $region21: #{gcn_encoder_forward.3} parent=11 // pred_check
        %p146 = pneg %p99
      $region22: #{gcn_encoder_forward.3} parent=11 // pred_check_branch
        %148 = sbr.rel (%p146) target = $region24
      $region23: #{gcn_encoder_forward.3} parent=11 // pred_region
        _
      $region24: #{gcn_encoder_forward.3} parent=11 // pred_fallthru
        _
    $region12: #{gcn_encoder_forward.3} parent=5 // pred_fallthru
      _
    %p149 = scmp.lt.s32.totalorder %s10, 2
    // Predicated region
    $region25: #{gcn_encoder_forward.3} parent=5 // pred_check
      %p150 = pneg %p149
    $region26: #{gcn_encoder_forward.3} parent=5 // pred_check_branch
      %152 = sbr.rel (%p150) target = $region28
    $region27: #{gcn_encoder_forward.3} parent=5 // pred_region
      // Predicated region
      $region29: #{gcn_encoder_forward.3} parent=27 // pred_check
        %p153 = pneg %p30
      $region30: #{gcn_encoder_forward.3} parent=27 // pred_check_branch
        %155 = sbr.rel (%p153) target = $region32
      $region31: #{gcn_encoder_forward.3} parent=27 // pred_region
        %s156 = smul.u32 32, %s10
        %p157 = scmp.lt.s32.totalorder %s156, 63
        %s158 = scalar_select %p157, %s156, 63
        %s159 = smul.addr %s158, 4
        %s160 = smul.addr %s159, 4
        %s161 = scalar_lea.vmem %s0, %s160
        %s162 = smul.u32 32, %s10
      $region32: #{gcn_encoder_forward.3} parent=27 // pred_fallthru
        _
    $region28: #{gcn_encoder_forward.3} parent=5 // pred_fallthru
      _
    %p163 = scmp.le.s32.totalorder 1, %s10
    %p164 = scmp.lt.s32.totalorder %s10, 3
    %p165 = pnand %p163, %p164
    %p166 = pneg %p165
    // Predicated region
    $region33: #{gcn_encoder_forward.3} parent=5 // pred_check
      _
    $region34: #{gcn_encoder_forward.3} parent=5 // pred_check_branch
      %168 = sbr.rel (%p165) target = $region36
    $region35: #{gcn_encoder_forward.3} parent=5 // pred_region
      %s169 = ssub.s32 %s10, 1
      %s170 = smul.u32 32, %s15
      %p171 = scmp.lt.s32.totalorder %s170, 63
      %s172 = scalar_select %p171, %s170, 63
      %s173 = smul.addr %s172, 4
      %s174 = smul.addr %s173, 4
      %s175 = scalar_lea.vmem %s0, %s174
      %p176 = pneg %p36
      %p177 = pneg %p33
      %p178 = pneg %p57
      %p179 = pneg %p54
      %p180 = pneg %p78
      %p181 = pneg %p75
      %p182 = pneg %p99
      %p183 = pneg %p96
      %p184 = pneg %p125
      %p185 = pneg %p122
      %s186 = smul.u32 32, %s15
      %p187 = scmp.lt.s32.totalorder %s186, 63
      %s188 = scalar_select %p187, %s186, 63
      %s189 = smul.addr %s188, 8
      %s190 = scalar_lea.vmem %s4, %s189
      %s191 = smul.u32 32, %s15
      %p192 = scmp.lt.s32.totalorder %s191, 63
      %s193 = scalar_select %p192, %s191, 63
      %s194 = smul.addr %s193, 4
      %s195 = smul.addr %s194, 4
      %s196 = scalar_lea.vmem %s0, %s195
      %s197 = smul.u32 32, %s15
      %s198 = smul.u32 32, %s15
      %p199 = scmp.lt.s32.totalorder %s198, 63
      %s200 = scalar_select %p199, %s198, 63
      %s201 = smul.addr %s200, 8
      %s202 = scalar_lea.vmem %s4, %s201
      %s203 = smul.u32 32, %s15
      %v205 = vld [vmem:[%s196] sm:$0xff]
      %v206 = vld [vmem:[%s196 + $0x8] sm:$0xff]
      %v207 = vld [vmem:[%s196 + $0x10] sm:$0xff]
      %v208 = vld [vmem:[%s196 + $0x18] sm:$0xff]
      %v209 = vld [vmem:[%s196 + $0x20] sm:$0xff]
      %v210 = vld [vmem:[%s196 + $0x28] sm:$0xff]
      %v211 = vld [vmem:[%s196 + $0x30] sm:$0xff]
      %v212 = vld [vmem:[%s196 + $0x38] sm:$0xff]
      %v213 = vld [vmem:[%s196 + $0x40] sm:$0xff]
      %v214 = vld [vmem:[%s196 + $0x48] sm:$0xff]
      %v215 = vld [vmem:[%s196 + $0x50] sm:$0xff]
      %v216 = vld [vmem:[%s196 + $0x58] sm:$0xff]
      %v217 = vld [vmem:[%s196 + $0x60] sm:$0xff]
      %v218 = vld [vmem:[%s196 + $0x68] sm:$0xff]
      %v219 = vld [vmem:[%s196 + $0x70] sm:$0xff]
      %v220 = vld [vmem:[%s196 + $0x78] sm:$0xff]
      %v221 = vld [vmem:[%s196 + $0x80] sm:$0xff]
      %v222 = vld [vmem:[%s196 + $0x88] sm:$0xff]
      %v223 = vld [vmem:[%s196 + $0x90] sm:$0xff]
      %v224 = vld [vmem:[%s196 + $0x98] sm:$0xff]
      %v225 = vld [vmem:[%s196 + $0xa0] sm:$0xff]
      %v226 = vld [vmem:[%s196 + $0xa8] sm:$0xff]
      %v227 = vld [vmem:[%s196 + $0xb0] sm:$0xff]
      %v228 = vld [vmem:[%s196 + $0xb8] sm:$0xff]
      %v229 = vld [vmem:[%s196 + $0xc0] sm:$0xff]
      %v230 = vld [vmem:[%s196 + $0xc8] sm:$0xff]
      %v231 = vld [vmem:[%s196 + $0xd0] sm:$0xff]
      %v232 = vld [vmem:[%s196 + $0xd8] sm:$0xff]
      %v233 = vld [vmem:[%s196 + $0xe0] sm:$0xff]
      %v234 = vld [vmem:[%s196 + $0xe8] sm:$0xff]
      %v235 = vld [vmem:[%s196 + $0xf0] sm:$0xff]
      %v236 = vld [vmem:[%s196 + $0xf8] sm:$0xff]
      %v237 = vld [vmem:[%s196 + $0x100] sm:$0xff]
      %v238 = vld [vmem:[%s196 + $0x108] sm:$0xff]
      %v239 = vld [vmem:[%s196 + $0x110] sm:$0xff]
      %v240 = vld [vmem:[%s196 + $0x118] sm:$0xff]
      %v241 = vld [vmem:[%s196 + $0x120] sm:$0xff]
      %v242 = vld [vmem:[%s196 + $0x128] sm:$0xff]
      %v243 = vld [vmem:[%s196 + $0x130] sm:$0xff]
      %v244 = vld [vmem:[%s196 + $0x138] sm:$0xff]
      %v245 = vld [vmem:[%s196 + $0x140] sm:$0xff]
      %v246 = vld [vmem:[%s196 + $0x148] sm:$0xff]
      %v247 = vld [vmem:[%s196 + $0x150] sm:$0xff]
      %v248 = vld [vmem:[%s196 + $0x158] sm:$0xff]
      %v249 = vld [vmem:[%s196 + $0x160] sm:$0xff]
      %v250 = vld [vmem:[%s196 + $0x168] sm:$0xff]
      %v251 = vld [vmem:[%s196 + $0x170] sm:$0xff]
      %v252 = vld [vmem:[%s196 + $0x178] sm:$0xff]
      %v253 = vld [vmem:[%s196 + $0x180] sm:$0xff]
      %v254 = vld [vmem:[%s196 + $0x188] sm:$0xff]
      %v255 = vld [vmem:[%s196 + $0x190] sm:$0xff]
      %v256 = vld [vmem:[%s196 + $0x198] sm:$0xff]
      %v257 = vld [vmem:[%s196 + $0x1a0] sm:$0xff]
      %v258 = vld [vmem:[%s196 + $0x1a8] sm:$0xff]
      %v259 = vld [vmem:[%s196 + $0x1b0] sm:$0xff]
      %v260 = vld [vmem:[%s196 + $0x1b8] sm:$0xff]
      %v261 = vld [vmem:[%s196 + $0x1c0] sm:$0xff]
      %v262 = vld [vmem:[%s196 + $0x1c8] sm:$0xff]
      %v263 = vld [vmem:[%s196 + $0x1d0] sm:$0xff]
      %v264 = vld [vmem:[%s196 + $0x1d8] sm:$0xff]
      %v265 = vld [vmem:[%s196 + $0x1e0] sm:$0xff]
      %v266 = vld [vmem:[%s196 + $0x1e8] sm:$0xff]
      %v267 = vld [vmem:[%s196 + $0x1f0] sm:$0xff]
      %v268 = vld [vmem:[%s196 + $0x1f8] sm:$0xff]
      %v269 = vld [vmem:[%s1] sm:$0xff]
      %v270 = vld [vmem:[%s1 + $0x8] sm:$0xff]
      %v271 = vld [vmem:[%s1 + $0x10] sm:$0xff]
      %v272 = vld [vmem:[%s1 + $0x18] sm:$0xff]
      %v273 = vld [vmem:[%s1 + $0x20] sm:$0xff]
      %v274 = vld [vmem:[%s1 + $0x28] sm:$0xff]
      %v275 = vld [vmem:[%s1 + $0x30] sm:$0xff]
      %v276 = vld [vmem:[%s1 + $0x38] sm:$0xff]
      %v277 = vld [vmem:[%s1 + $0x40] sm:$0xff]
      %v278 = vld [vmem:[%s1 + $0x48] sm:$0xff]
      %v279 = vld [vmem:[%s1 + $0x50] sm:$0xff]
      %v280 = vld [vmem:[%s1 + $0x58] sm:$0xff]
      %v281 = vld [vmem:[%s1 + $0x60] sm:$0xff]
      %v282 = vld [vmem:[%s1 + $0x68] sm:$0xff]
      %v283 = vld [vmem:[%s1 + $0x70] sm:$0xff]
      %v284 = vld [vmem:[%s1 + $0x78] sm:$0xff]
      %v285 = vld [vmem:[%s1 + $0x80] sm:$0xff]
      %v286 = vld [vmem:[%s1 + $0x88] sm:$0xff]
      %v287 = vld [vmem:[%s1 + $0x90] sm:$0xff]
      %v288 = vld [vmem:[%s1 + $0x98] sm:$0xff]
      %v289 = vld [vmem:[%s1 + $0xa0] sm:$0xff]
      %v290 = vld [vmem:[%s1 + $0xa8] sm:$0xff]
      %v291 = vld [vmem:[%s1 + $0xb0] sm:$0xff]
      %v292 = vld [vmem:[%s1 + $0xb8] sm:$0xff]
      %v293 = vld [vmem:[%s1 + $0xc0] sm:$0xff]
      %v294 = vld [vmem:[%s1 + $0xc8] sm:$0xff]
      %v295 = vld [vmem:[%s1 + $0xd0] sm:$0xff]
      %v296 = vld [vmem:[%s1 + $0xd8] sm:$0xff]
      %v297 = vld [vmem:[%s1 + $0xe0] sm:$0xff]
      %v298 = vld [vmem:[%s1 + $0xe8] sm:$0xff]
      %v299 = vld [vmem:[%s1 + $0xf0] sm:$0xff]
      %v300 = vld [vmem:[%s1 + $0xf8] sm:$0xff]
      %v301 = vld [vmem:[%s1 + $0x100] sm:$0xff]
      %v302 = vld [vmem:[%s1 + $0x108] sm:$0xff]
      %v303 = vld [vmem:[%s1 + $0x110] sm:$0xff]
      %v304 = vld [vmem:[%s1 + $0x118] sm:$0xff]
      %v305 = vld [vmem:[%s1 + $0x120] sm:$0xff]
      %v306 = vld [vmem:[%s1 + $0x128] sm:$0xff]
      %v307 = vld [vmem:[%s1 + $0x130] sm:$0xff]
      %v308 = vld [vmem:[%s1 + $0x138] sm:$0xff]
      %v309 = vld [vmem:[%s1 + $0x140] sm:$0xff]
      %v310 = vld [vmem:[%s1 + $0x148] sm:$0xff]
      %v311 = vld [vmem:[%s1 + $0x150] sm:$0xff]
      %v312 = vld [vmem:[%s1 + $0x158] sm:$0xff]
      %v313 = vld [vmem:[%s1 + $0x160] sm:$0xff]
      %v314 = vld [vmem:[%s1 + $0x168] sm:$0xff]
      %v315 = vld [vmem:[%s1 + $0x170] sm:$0xff]
      %v316 = vld [vmem:[%s1 + $0x178] sm:$0xff]
      %v317 = vld [vmem:[%s1 + $0x180] sm:$0xff]
      %v318 = vld [vmem:[%s1 + $0x188] sm:$0xff]
      %v319 = vld [vmem:[%s1 + $0x190] sm:$0xff]
      %v320 = vld [vmem:[%s1 + $0x198] sm:$0xff]
      %v321 = vld [vmem:[%s1 + $0x1a0] sm:$0xff]
      %v322 = vld [vmem:[%s1 + $0x1a8] sm:$0xff]
      %v323 = vld [vmem:[%s1 + $0x1b0] sm:$0xff]
      %v324 = vld [vmem:[%s1 + $0x1b8] sm:$0xff]
      %v325 = vld [vmem:[%s1 + $0x1c0] sm:$0xff]
      %v326 = vld [vmem:[%s1 + $0x1c8] sm:$0xff]
      %v327 = vld [vmem:[%s1 + $0x1d0] sm:$0xff]
      %v328 = vld [vmem:[%s1 + $0x1d8] sm:$0xff]
      %v329 = vld [vmem:[%s1 + $0x1e0] sm:$0xff]
      %v330 = vld [vmem:[%s1 + $0x1e8] sm:$0xff]
      %v331 = vld [vmem:[%s1 + $0x1f0] sm:$0xff]
      %v332 = vld [vmem:[%s1 + $0x1f8] sm:$0xff]
      %v397 = vunpack.c.l.b16 %v205
      %v398 = vunpack.c.h.b16 %v205
      %v399 = vunpack.c.l.b16 %v206
      %v400 = vunpack.c.h.b16 %v206
      %v401 = vunpack.c.l.b16 %v207
      %v402 = vunpack.c.h.b16 %v207
      %v403 = vunpack.c.l.b16 %v208
      %v404 = vunpack.c.h.b16 %v208
      %v405 = vunpack.c.l.b16 %v209
      %v406 = vunpack.c.h.b16 %v209
      %v407 = vunpack.c.l.b16 %v210
      %v408 = vunpack.c.h.b16 %v210
      %v409 = vunpack.c.l.b16 %v211
      %v410 = vunpack.c.h.b16 %v211
      %v411 = vunpack.c.l.b16 %v212
      %v412 = vunpack.c.h.b16 %v212
      %v413 = vunpack.c.l.b16 %v213
      %v414 = vunpack.c.h.b16 %v213
      %v415 = vunpack.c.l.b16 %v214
      %v416 = vunpack.c.h.b16 %v214
      %v417 = vunpack.c.l.b16 %v215
      %v418 = vunpack.c.h.b16 %v215
      %v419 = vunpack.c.l.b16 %v216
      %v420 = vunpack.c.h.b16 %v216
      %v421 = vunpack.c.l.b16 %v217
      %v422 = vunpack.c.h.b16 %v217
      %v423 = vunpack.c.l.b16 %v218
      %v424 = vunpack.c.h.b16 %v218
      %v425 = vunpack.c.l.b16 %v219
      %v426 = vunpack.c.h.b16 %v219
      %v427 = vunpack.c.l.b16 %v220
      %v428 = vunpack.c.h.b16 %v220
      %v429 = vunpack.c.l.b16 %v221
      %v430 = vunpack.c.h.b16 %v221
      %v431 = vunpack.c.l.b16 %v222
      %v432 = vunpack.c.h.b16 %v222
      %v433 = vunpack.c.l.b16 %v223
      %v434 = vunpack.c.h.b16 %v223
      %v435 = vunpack.c.l.b16 %v224
      %v436 = vunpack.c.h.b16 %v224
      %v437 = vunpack.c.l.b16 %v225
      %v438 = vunpack.c.h.b16 %v225
      %v439 = vunpack.c.l.b16 %v226
      %v440 = vunpack.c.h.b16 %v226
      %v441 = vunpack.c.l.b16 %v227
      %v442 = vunpack.c.h.b16 %v227
      %v443 = vunpack.c.l.b16 %v228
      %v444 = vunpack.c.h.b16 %v228
      %v445 = vunpack.c.l.b16 %v229
      %v446 = vunpack.c.h.b16 %v229
      %v447 = vunpack.c.l.b16 %v230
      %v448 = vunpack.c.h.b16 %v230
      %v449 = vunpack.c.l.b16 %v231
      %v450 = vunpack.c.h.b16 %v231
      %v451 = vunpack.c.l.b16 %v232
      %v452 = vunpack.c.h.b16 %v232
      %v453 = vunpack.c.l.b16 %v233
      %v454 = vunpack.c.h.b16 %v233
      %v455 = vunpack.c.l.b16 %v234
      %v456 = vunpack.c.h.b16 %v234
      %v457 = vunpack.c.l.b16 %v235
      %v458 = vunpack.c.h.b16 %v235
      %v459 = vunpack.c.l.b16 %v236
      %v460 = vunpack.c.h.b16 %v236
      %v461 = vunpack.c.l.b16 %v237
      %v462 = vunpack.c.h.b16 %v237
      %v463 = vunpack.c.l.b16 %v238
      %v464 = vunpack.c.h.b16 %v238
      %v465 = vunpack.c.l.b16 %v239
      %v466 = vunpack.c.h.b16 %v239
      %v467 = vunpack.c.l.b16 %v240
      %v468 = vunpack.c.h.b16 %v240
      %v469 = vunpack.c.l.b16 %v241
      %v470 = vunpack.c.h.b16 %v241
      %v471 = vunpack.c.l.b16 %v242
      %v472 = vunpack.c.h.b16 %v242
      %v473 = vunpack.c.l.b16 %v243
      %v474 = vunpack.c.h.b16 %v243
      %v475 = vunpack.c.l.b16 %v244
      %v476 = vunpack.c.h.b16 %v244
      %v477 = vunpack.c.l.b16 %v245
      %v478 = vunpack.c.h.b16 %v245
      %v479 = vunpack.c.l.b16 %v246
      %v480 = vunpack.c.h.b16 %v246
      %v481 = vunpack.c.l.b16 %v247
      %v482 = vunpack.c.h.b16 %v247
      %v483 = vunpack.c.l.b16 %v248
      %v484 = vunpack.c.h.b16 %v248
      %v485 = vunpack.c.l.b16 %v249
      %v486 = vunpack.c.h.b16 %v249
      %v487 = vunpack.c.l.b16 %v250
      %v488 = vunpack.c.h.b16 %v250
      %v489 = vunpack.c.l.b16 %v251
      %v490 = vunpack.c.h.b16 %v251
      %v491 = vunpack.c.l.b16 %v252
      %v492 = vunpack.c.h.b16 %v252
      %v493 = vunpack.c.l.b16 %v253
      %v494 = vunpack.c.h.b16 %v253
      %v495 = vunpack.c.l.b16 %v254
      %v496 = vunpack.c.h.b16 %v254
      %v497 = vunpack.c.l.b16 %v255
      %v498 = vunpack.c.h.b16 %v255
      %v499 = vunpack.c.l.b16 %v256
      %v500 = vunpack.c.h.b16 %v256
      %v501 = vunpack.c.l.b16 %v257
      %v502 = vunpack.c.h.b16 %v257
      %v503 = vunpack.c.l.b16 %v258
      %v504 = vunpack.c.h.b16 %v258
      %v505 = vunpack.c.l.b16 %v259
      %v506 = vunpack.c.h.b16 %v259
      %v507 = vunpack.c.l.b16 %v260
      %v508 = vunpack.c.h.b16 %v260
      %v509 = vunpack.c.l.b16 %v261
      %v510 = vunpack.c.h.b16 %v261
      %v511 = vunpack.c.l.b16 %v262
      %v512 = vunpack.c.h.b16 %v262
      %v513 = vunpack.c.l.b16 %v263
      %v514 = vunpack.c.h.b16 %v263
      %v515 = vunpack.c.l.b16 %v264
      %v516 = vunpack.c.h.b16 %v264
      %v517 = vunpack.c.l.b16 %v265
      %v518 = vunpack.c.h.b16 %v265
      %v519 = vunpack.c.l.b16 %v266
      %v520 = vunpack.c.h.b16 %v266
      %v521 = vunpack.c.l.b16 %v267
      %v522 = vunpack.c.h.b16 %v267
      %v523 = vunpack.c.l.b16 %v268
      %v524 = vunpack.c.h.b16 %v268
      %v525 = vpack.c.b16 %v401, %v397
      %v526 = vpack.c.b16 %v402, %v398
      %v527 = vpack.c.b16 %v403, %v399
      %v528 = vpack.c.b16 %v404, %v400
      %v529 = vpack.c.b16 %v409, %v405
      %v530 = vpack.c.b16 %v410, %v406
      %v531 = vpack.c.b16 %v411, %v407
      %v532 = vpack.c.b16 %v412, %v408
      %v533 = vpack.c.b16 %v417, %v413
      %v534 = vpack.c.b16 %v418, %v414
      %v535 = vpack.c.b16 %v419, %v415
      %v536 = vpack.c.b16 %v420, %v416
      %v537 = vpack.c.b16 %v425, %v421
      %v538 = vpack.c.b16 %v426, %v422
      %v539 = vpack.c.b16 %v427, %v423
      %v540 = vpack.c.b16 %v428, %v424
      %v541 = vpack.c.b16 %v433, %v429
      %v542 = vpack.c.b16 %v434, %v430
      %v543 = vpack.c.b16 %v435, %v431
      %v544 = vpack.c.b16 %v436, %v432
      %v545 = vpack.c.b16 %v441, %v437
      %v546 = vpack.c.b16 %v442, %v438
      %v547 = vpack.c.b16 %v443, %v439
      %v548 = vpack.c.b16 %v444, %v440
      %v549 = vpack.c.b16 %v449, %v445
      %v550 = vpack.c.b16 %v450, %v446
      %v551 = vpack.c.b16 %v451, %v447
      %v552 = vpack.c.b16 %v452, %v448
      %v553 = vpack.c.b16 %v457, %v453
      %v554 = vpack.c.b16 %v458, %v454
      %v555 = vpack.c.b16 %v459, %v455
      %v556 = vpack.c.b16 %v460, %v456
      %v557 = vpack.c.b16 %v465, %v461
      %v558 = vpack.c.b16 %v466, %v462
      %v559 = vpack.c.b16 %v467, %v463
      %v560 = vpack.c.b16 %v468, %v464
      %v561 = vpack.c.b16 %v473, %v469
      %v562 = vpack.c.b16 %v474, %v470
      %v563 = vpack.c.b16 %v475, %v471
      %v564 = vpack.c.b16 %v476, %v472
      %v565 = vpack.c.b16 %v481, %v477
      %v566 = vpack.c.b16 %v482, %v478
      %v567 = vpack.c.b16 %v483, %v479
      %v568 = vpack.c.b16 %v484, %v480
      %v569 = vpack.c.b16 %v489, %v485
      %v570 = vpack.c.b16 %v490, %v486
      %v571 = vpack.c.b16 %v491, %v487
      %v572 = vpack.c.b16 %v492, %v488
      %v573 = vpack.c.b16 %v497, %v493
      %v574 = vpack.c.b16 %v498, %v494
      %v575 = vpack.c.b16 %v499, %v495
      %v576 = vpack.c.b16 %v500, %v496
      %v577 = vpack.c.b16 %v505, %v501
      %v578 = vpack.c.b16 %v506, %v502
      %v579 = vpack.c.b16 %v507, %v503
      %v580 = vpack.c.b16 %v508, %v504
      %v581 = vpack.c.b16 %v513, %v509
      %v582 = vpack.c.b16 %v514, %v510
      %v583 = vpack.c.b16 %v515, %v511
      %v584 = vpack.c.b16 %v516, %v512
      %v585 = vpack.c.b16 %v521, %v517
      %v586 = vpack.c.b16 %v522, %v518
      %v587 = vpack.c.b16 %v523, %v519
      %v588 = vpack.c.b16 %v524, %v520
      %v717 = vunpack.c.l.b16 %v269
      %v718 = vunpack.c.h.b16 %v269
      %v719 = vunpack.c.l.b16 %v270
      %v720 = vunpack.c.h.b16 %v270
      %v721 = vunpack.c.l.b16 %v271
      %v722 = vunpack.c.h.b16 %v271
      %v723 = vunpack.c.l.b16 %v272
      %v724 = vunpack.c.h.b16 %v272
      %v725 = vunpack.c.l.b16 %v273
      %v726 = vunpack.c.h.b16 %v273
      %v727 = vunpack.c.l.b16 %v274
      %v728 = vunpack.c.h.b16 %v274
      %v729 = vunpack.c.l.b16 %v275
      %v730 = vunpack.c.h.b16 %v275
      %v731 = vunpack.c.l.b16 %v276
      %v732 = vunpack.c.h.b16 %v276
      %v733 = vunpack.c.l.b16 %v277
      %v734 = vunpack.c.h.b16 %v277
      %v735 = vunpack.c.l.b16 %v278
      %v736 = vunpack.c.h.b16 %v278
      %v737 = vunpack.c.l.b16 %v279
      %v738 = vunpack.c.h.b16 %v279
      %v739 = vunpack.c.l.b16 %v280
      %v740 = vunpack.c.h.b16 %v280
      %v741 = vunpack.c.l.b16 %v281
      %v742 = vunpack.c.h.b16 %v281
      %v743 = vunpack.c.l.b16 %v282
      %v744 = vunpack.c.h.b16 %v282
      %v745 = vunpack.c.l.b16 %v283
      %v746 = vunpack.c.h.b16 %v283
      %v747 = vunpack.c.l.b16 %v284
      %v748 = vunpack.c.h.b16 %v284
      %v749 = vunpack.c.l.b16 %v285
      %v750 = vunpack.c.h.b16 %v285
      %v751 = vunpack.c.l.b16 %v286
      %v752 = vunpack.c.h.b16 %v286
      %v753 = vunpack.c.l.b16 %v287
      %v754 = vunpack.c.h.b16 %v287
      %v755 = vunpack.c.l.b16 %v288
      %v756 = vunpack.c.h.b16 %v288
      %v757 = vunpack.c.l.b16 %v289
      %v758 = vunpack.c.h.b16 %v289
      %v759 = vunpack.c.l.b16 %v290
      %v760 = vunpack.c.h.b16 %v290
      %v761 = vunpack.c.l.b16 %v291
      %v762 = vunpack.c.h.b16 %v291
      %v763 = vunpack.c.l.b16 %v292
      %v764 = vunpack.c.h.b16 %v292
      %v765 = vunpack.c.l.b16 %v293
      %v766 = vunpack.c.h.b16 %v293
      %v767 = vunpack.c.l.b16 %v294
      %v768 = vunpack.c.h.b16 %v294
      %v769 = vunpack.c.l.b16 %v295
      %v770 = vunpack.c.h.b16 %v295
      %v771 = vunpack.c.l.b16 %v296
      %v772 = vunpack.c.h.b16 %v296
      %v773 = vunpack.c.l.b16 %v297
      %v774 = vunpack.c.h.b16 %v297
      %v775 = vunpack.c.l.b16 %v298
      %v776 = vunpack.c.h.b16 %v298
      %v777 = vunpack.c.l.b16 %v299
      %v778 = vunpack.c.h.b16 %v299
      %v779 = vunpack.c.l.b16 %v300
      %v780 = vunpack.c.h.b16 %v300
      %v781 = vunpack.c.l.b16 %v301
      %v782 = vunpack.c.h.b16 %v301
      %v783 = vunpack.c.l.b16 %v302
      %v784 = vunpack.c.h.b16 %v302
      %v785 = vunpack.c.l.b16 %v303
      %v786 = vunpack.c.h.b16 %v303
      %v787 = vunpack.c.l.b16 %v304
      %v788 = vunpack.c.h.b16 %v304
      %v789 = vunpack.c.l.b16 %v305
      %v790 = vunpack.c.h.b16 %v305
      %v791 = vunpack.c.l.b16 %v306
      %v792 = vunpack.c.h.b16 %v306
      %v793 = vunpack.c.l.b16 %v307
      %v794 = vunpack.c.h.b16 %v307
      %v795 = vunpack.c.l.b16 %v308
      %v796 = vunpack.c.h.b16 %v308
      %v797 = vunpack.c.l.b16 %v309
      %v798 = vunpack.c.h.b16 %v309
      %v799 = vunpack.c.l.b16 %v310
      %v800 = vunpack.c.h.b16 %v310
      %v801 = vunpack.c.l.b16 %v311
      %v802 = vunpack.c.h.b16 %v311
      %v803 = vunpack.c.l.b16 %v312
      %v804 = vunpack.c.h.b16 %v312
      %v805 = vunpack.c.l.b16 %v313
      %v806 = vunpack.c.h.b16 %v313
      %v807 = vunpack.c.l.b16 %v314
      %v808 = vunpack.c.h.b16 %v314
      %v809 = vunpack.c.l.b16 %v315
      %v810 = vunpack.c.h.b16 %v315
      %v811 = vunpack.c.l.b16 %v316
      %v812 = vunpack.c.h.b16 %v316
      %v813 = vunpack.c.l.b16 %v317
      %v814 = vunpack.c.h.b16 %v317
      %v815 = vunpack.c.l.b16 %v318
      %v816 = vunpack.c.h.b16 %v318
      %v817 = vunpack.c.l.b16 %v319
      %v818 = vunpack.c.h.b16 %v319
      %v819 = vunpack.c.l.b16 %v320
      %v820 = vunpack.c.h.b16 %v320
      %v821 = vunpack.c.l.b16 %v321
      %v822 = vunpack.c.h.b16 %v321
      %v823 = vunpack.c.l.b16 %v322
      %v824 = vunpack.c.h.b16 %v322
      %v825 = vunpack.c.l.b16 %v323
      %v826 = vunpack.c.h.b16 %v323
      %v827 = vunpack.c.l.b16 %v324
      %v828 = vunpack.c.h.b16 %v324
      %v829 = vunpack.c.l.b16 %v325
      %v830 = vunpack.c.h.b16 %v325
      %v831 = vunpack.c.l.b16 %v326
      %v832 = vunpack.c.h.b16 %v326
      %v833 = vunpack.c.l.b16 %v327
      %v834 = vunpack.c.h.b16 %v327
      %v835 = vunpack.c.l.b16 %v328
      %v836 = vunpack.c.h.b16 %v328
      %v837 = vunpack.c.l.b16 %v329
      %v838 = vunpack.c.h.b16 %v329
      %v839 = vunpack.c.l.b16 %v330
      %v840 = vunpack.c.h.b16 %v330
      %v841 = vunpack.c.l.b16 %v331
      %v842 = vunpack.c.h.b16 %v331
      %v843 = vunpack.c.l.b16 %v332
      %v844 = vunpack.c.h.b16 %v332
      %v845 = vpack.c.b16 %v719, %v717
      %v846 = vpack.c.b16 %v720, %v718
      %v847 = vpack.c.b16 %v723, %v721
      %v848 = vpack.c.b16 %v724, %v722
      %v849 = vpack.c.b16 %v727, %v725
      %v850 = vpack.c.b16 %v728, %v726
      %v851 = vpack.c.b16 %v731, %v729
      %v852 = vpack.c.b16 %v732, %v730
      %v853 = vpack.c.b16 %v735, %v733
      %v854 = vpack.c.b16 %v736, %v734
      %v855 = vpack.c.b16 %v739, %v737
      %v856 = vpack.c.b16 %v740, %v738
      %v857 = vpack.c.b16 %v743, %v741
      %v858 = vpack.c.b16 %v744, %v742
      %v859 = vpack.c.b16 %v747, %v745
      %v860 = vpack.c.b16 %v748, %v746
      %v861 = vpack.c.b16 %v751, %v749
      %v862 = vpack.c.b16 %v752, %v750
      %v863 = vpack.c.b16 %v755, %v753
      %v864 = vpack.c.b16 %v756, %v754
      %v865 = vpack.c.b16 %v759, %v757
      %v866 = vpack.c.b16 %v760, %v758
      %v867 = vpack.c.b16 %v763, %v761
      %v868 = vpack.c.b16 %v764, %v762
      %v869 = vpack.c.b16 %v767, %v765
      %v870 = vpack.c.b16 %v768, %v766
      %v871 = vpack.c.b16 %v771, %v769
      %v872 = vpack.c.b16 %v772, %v770
      %v873 = vpack.c.b16 %v775, %v773
      %v874 = vpack.c.b16 %v776, %v774
      %v875 = vpack.c.b16 %v779, %v777
      %v876 = vpack.c.b16 %v780, %v778
      %v877 = vpack.c.b16 %v783, %v781
      %v878 = vpack.c.b16 %v784, %v782
      %v879 = vpack.c.b16 %v787, %v785
      %v880 = vpack.c.b16 %v788, %v786
      %v881 = vpack.c.b16 %v791, %v789
      %v882 = vpack.c.b16 %v792, %v790
      %v883 = vpack.c.b16 %v795, %v793
      %v884 = vpack.c.b16 %v796, %v794
      %v885 = vpack.c.b16 %v799, %v797
      %v886 = vpack.c.b16 %v800, %v798
      %v887 = vpack.c.b16 %v803, %v801
      %v888 = vpack.c.b16 %v804, %v802
      %v889 = vpack.c.b16 %v807, %v805
      %v890 = vpack.c.b16 %v808, %v806
      %v891 = vpack.c.b16 %v811, %v809
      %v892 = vpack.c.b16 %v812, %v810
      %v893 = vpack.c.b16 %v815, %v813
      %v894 = vpack.c.b16 %v816, %v814
      %v895 = vpack.c.b16 %v819, %v817
      %v896 = vpack.c.b16 %v820, %v818
      %v897 = vpack.c.b16 %v823, %v821
      %v898 = vpack.c.b16 %v824, %v822
      %v899 = vpack.c.b16 %v827, %v825
      %v900 = vpack.c.b16 %v828, %v826
      %v901 = vpack.c.b16 %v831, %v829
      %v902 = vpack.c.b16 %v832, %v830
      %v903 = vpack.c.b16 %v835, %v833
      %v904 = vpack.c.b16 %v836, %v834
      %v905 = vpack.c.b16 %v839, %v837
      %v906 = vpack.c.b16 %v840, %v838
      %v907 = vpack.c.b16 %v843, %v841
      %v908 = vpack.c.b16 %v844, %v842
      %973 = vmatprep.subr.bf16.mxu0 %v860
      %974 = vmatpush1.bf16.msra.mxu0 %v859
      %975 = vmatprep.subr.bf16.mxu0 %v858
      %976 = vmatpush1.bf16.msra.mxu0 %v857
      %977 = vmatprep.subr.bf16.mxu0 %v856
      %978 = vmatpush1.bf16.msra.mxu0 %v855
      %979 = vmatprep.subr.bf16.mxu0 %v854
      %980 = vmatpush1.bf16.msra.mxu0 %v853
      %981 = vmatprep.subr.bf16.mxu0 %v852
      %982 = vmatpush1.bf16.msra.mxu0 %v851
      %983 = vmatprep.subr.bf16.mxu0 %v850
      %984 = vmatpush1.bf16.msra.mxu0 %v849
      %985 = vmatprep.subr.bf16.mxu0 %v848
      %986 = vmatpush1.bf16.msra.mxu0 %v847
      %987 = vmatprep.subr.bf16.mxu0 %v846
      %988 = vmatpush1.bf16.msra.mxu0 %v845
      %989 = vmatprep.subr.bf16.mxu0 %v876
      %990 = vmatpush2.bf16.msra.mxu0 %v875
      %991 = vmatprep.subr.bf16.mxu0 %v874
      %992 = vmatpush2.bf16.msra.mxu0 %v873
      %993 = vmatprep.subr.bf16.mxu0 %v872
      %994 = vmatpush2.bf16.msra.mxu0 %v871
      %995 = vmatprep.subr.bf16.mxu0 %v870
      %996 = vmatpush2.bf16.msra.mxu0 %v869
      %997 = vmatprep.subr.bf16.mxu0 %v868
      %998 = vmatpush2.bf16.msra.mxu0 %v867
      %999 = vmatprep.subr.bf16.mxu0 %v866
      %1000 = vmatpush2.bf16.msra.mxu0 %v865
      %1001 = vmatprep.subr.bf16.mxu0 %v864
      %1002 = vmatpush2.bf16.msra.mxu0 %v863
      %1003 = vmatprep.subr.bf16.mxu0 %v862
      %1004 = vmatpush2.bf16.msra.mxu0 %v861
      %1005 = vmatprep.mubr.bf16.mxu0 %v526
      %1006 = vmatmul.mubr.bf16.gmra.mxu0 %v525
      %v1007 = vpop.f32.mrf.mxu0
      %v1008 = vadd.f32 0.0, %v1007
      %v1009 = vpop.f32.mrf.mxu0
      %v1010 = vadd.f32 0.0, %v1009
      %v1011 = vpop.f32.mrf.mxu0
      %v1012 = vadd.f32 0.0, %v1011
      %v1013 = vpop.f32.mrf.mxu0
      %v1014 = vadd.f32 0.0, %v1013
      %1015 = vmatprep.mubr.bf16.mxu0 %v530
      %1016 = vmatmul.mubr.bf16.gmra.mxu0 %v529
      %v1017 = vpop.f32.mrf.mxu0
      %v1018 = vadd.f32 0.0, %v1017
      %v1019 = vpop.f32.mrf.mxu0
      %v1020 = vadd.f32 0.0, %v1019
      %v1021 = vpop.f32.mrf.mxu0
      %v1022 = vadd.f32 0.0, %v1021
      %v1023 = vpop.f32.mrf.mxu0
      %v1024 = vadd.f32 0.0, %v1023
      %1025 = vmatprep.mubr.bf16.mxu0 %v534
      %1026 = vmatmul.mubr.bf16.gmra.mxu0 %v533
      %v1027 = vpop.f32.mrf.mxu0
      %v1028 = vadd.f32 0.0, %v1027
      %v1029 = vpop.f32.mrf.mxu0
      %v1030 = vadd.f32 0.0, %v1029
      %v1031 = vpop.f32.mrf.mxu0
      %v1032 = vadd.f32 0.0, %v1031
      %v1033 = vpop.f32.mrf.mxu0
      %v1034 = vadd.f32 0.0, %v1033
      %1035 = vmatprep.mubr.bf16.mxu0 %v538
      %1036 = vmatmul.mubr.bf16.gmra.mxu0 %v537
      %v1037 = vpop.f32.mrf.mxu0
      %v1038 = vadd.f32 0.0, %v1037
      %v1039 = vpop.f32.mrf.mxu0
      %v1040 = vadd.f32 0.0, %v1039
      %v1041 = vpop.f32.mrf.mxu0
      %v1042 = vadd.f32 0.0, %v1041
      %v1043 = vpop.f32.mrf.mxu0
      %v1044 = vadd.f32 0.0, %v1043
      %1045 = vmatprep.mubr.bf16.mxu0 %v542
      %1046 = vmatmul.mubr.bf16.gmra.mxu0 %v541
      %v1047 = vpop.f32.mrf.mxu0
      %v1048 = vadd.f32 0.0, %v1047
      %v1049 = vpop.f32.mrf.mxu0
      %v1050 = vadd.f32 0.0, %v1049
      %v1051 = vpop.f32.mrf.mxu0
      %v1052 = vadd.f32 0.0, %v1051
      %v1053 = vpop.f32.mrf.mxu0
      %v1054 = vadd.f32 0.0, %v1053
      %1055 = vmatprep.mubr.bf16.mxu0 %v546
      %1056 = vmatmul.mubr.bf16.gmra.mxu0 %v545
      %v1057 = vpop.f32.mrf.mxu0
      %v1058 = vadd.f32 0.0, %v1057
      %v1059 = vpop.f32.mrf.mxu0
      %v1060 = vadd.f32 0.0, %v1059
      %v1061 = vpop.f32.mrf.mxu0
      %v1062 = vadd.f32 0.0, %v1061
      %v1063 = vpop.f32.mrf.mxu0
      %v1064 = vadd.f32 0.0, %v1063
      %1065 = vmatprep.mubr.bf16.mxu0 %v550
      %1066 = vmatmul.mubr.bf16.gmra.mxu0 %v549
      %v1067 = vpop.f32.mrf.mxu0
      %v1068 = vadd.f32 0.0, %v1067
      %v1069 = vpop.f32.mrf.mxu0
      %v1070 = vadd.f32 0.0, %v1069
      %v1071 = vpop.f32.mrf.mxu0
      %v1072 = vadd.f32 0.0, %v1071
      %v1073 = vpop.f32.mrf.mxu0
      %v1074 = vadd.f32 0.0, %v1073
      %1075 = vmatprep.mubr.bf16.mxu0 %v554
      %1076 = vmatmul.mubr.bf16.gmra.mxu0 %v553
      %v1077 = vpop.f32.mrf.mxu0
      %v1078 = vadd.f32 0.0, %v1077
      %v1079 = vpop.f32.mrf.mxu0
      %v1080 = vadd.f32 0.0, %v1079
      %v1081 = vpop.f32.mrf.mxu0
      %v1082 = vadd.f32 0.0, %v1081
      %v1083 = vpop.f32.mrf.mxu0
      %v1084 = vadd.f32 0.0, %v1083
      %1085 = vmatprep.mubr.bf16.mxu0 %v558
      %1086 = vmatmul.mubr.bf16.gmra.mxu0 %v557
      %v1087 = vpop.f32.mrf.mxu0
      %v1088 = vadd.f32 0.0, %v1087
      %v1089 = vpop.f32.mrf.mxu0
      %v1090 = vadd.f32 0.0, %v1089
      %v1091 = vpop.f32.mrf.mxu0
      %v1092 = vadd.f32 0.0, %v1091
      %v1093 = vpop.f32.mrf.mxu0
      %v1094 = vadd.f32 0.0, %v1093
      %1095 = vmatprep.mubr.bf16.mxu0 %v562
      %1096 = vmatmul.mubr.bf16.gmra.mxu0 %v561
      %v1097 = vpop.f32.mrf.mxu0
      %v1098 = vadd.f32 0.0, %v1097
      %v1099 = vpop.f32.mrf.mxu0
      %v1100 = vadd.f32 0.0, %v1099
      %v1101 = vpop.f32.mrf.mxu0
      %v1102 = vadd.f32 0.0, %v1101
      %v1103 = vpop.f32.mrf.mxu0
      %v1104 = vadd.f32 0.0, %v1103
      %1105 = vmatprep.mubr.bf16.mxu0 %v566
      %1106 = vmatmul.mubr.bf16.gmra.mxu0 %v565
      %v1107 = vpop.f32.mrf.mxu0
      %v1108 = vadd.f32 0.0, %v1107
      %v1109 = vpop.f32.mrf.mxu0
      %v1110 = vadd.f32 0.0, %v1109
      %v1111 = vpop.f32.mrf.mxu0
      %v1112 = vadd.f32 0.0, %v1111
      %v1113 = vpop.f32.mrf.mxu0
      %v1114 = vadd.f32 0.0, %v1113
      %1115 = vmatprep.mubr.bf16.mxu0 %v570
      %1116 = vmatmul.mubr.bf16.gmra.mxu0 %v569
      %v1117 = vpop.f32.mrf.mxu0
      %v1118 = vadd.f32 0.0, %v1117
      %v1119 = vpop.f32.mrf.mxu0
      %v1120 = vadd.f32 0.0, %v1119
      %v1121 = vpop.f32.mrf.mxu0
      %v1122 = vadd.f32 0.0, %v1121
      %v1123 = vpop.f32.mrf.mxu0
      %v1124 = vadd.f32 0.0, %v1123
      %1125 = vmatprep.mubr.bf16.mxu0 %v574
      %1126 = vmatmul.mubr.bf16.gmra.mxu0 %v573
      %v1127 = vpop.f32.mrf.mxu0
      %v1128 = vadd.f32 0.0, %v1127
      %v1129 = vpop.f32.mrf.mxu0
      %v1130 = vadd.f32 0.0, %v1129
      %v1131 = vpop.f32.mrf.mxu0
      %v1132 = vadd.f32 0.0, %v1131
      %v1133 = vpop.f32.mrf.mxu0
      %v1134 = vadd.f32 0.0, %v1133
      %1135 = vmatprep.mubr.bf16.mxu0 %v578
      %1136 = vmatmul.mubr.bf16.gmra.mxu0 %v577
      %v1137 = vpop.f32.mrf.mxu0
      %v1138 = vadd.f32 0.0, %v1137
      %v1139 = vpop.f32.mrf.mxu0
      %v1140 = vadd.f32 0.0, %v1139
      %v1141 = vpop.f32.mrf.mxu0
      %v1142 = vadd.f32 0.0, %v1141
      %v1143 = vpop.f32.mrf.mxu0
      %v1144 = vadd.f32 0.0, %v1143
      %1145 = vmatprep.mubr.bf16.mxu0 %v582
      %1146 = vmatmul.mubr.bf16.gmra.mxu0 %v581
      %v1147 = vpop.f32.mrf.mxu0
      %v1148 = vadd.f32 0.0, %v1147
      %v1149 = vpop.f32.mrf.mxu0
      %v1150 = vadd.f32 0.0, %v1149
      %v1151 = vpop.f32.mrf.mxu0
      %v1152 = vadd.f32 0.0, %v1151
      %v1153 = vpop.f32.mrf.mxu0
      %v1154 = vadd.f32 0.0, %v1153
      %1155 = vmatprep.mubr.bf16.mxu0 %v586
      %1156 = vmatmul.mubr.bf16.gmra.mxu0 %v585
      %v1157 = vpop.f32.mrf.mxu0
      %v1158 = vadd.f32 0.0, %v1157
      %v1159 = vpop.f32.mrf.mxu0
      %v1160 = vadd.f32 0.0, %v1159
      %v1161 = vpop.f32.mrf.mxu0
      %v1162 = vadd.f32 0.0, %v1161
      %v1163 = vpop.f32.mrf.mxu0
      %v1164 = vadd.f32 0.0, %v1163
      %1165 = vdwg.mxu0
      %1166 = vmatprep.subr.bf16.mxu0 %v892
      %1167 = vmatpush1.bf16.msra.mxu0 %v891
      %1168 = vmatprep.subr.bf16.mxu0 %v890
      %1169 = vmatpush1.bf16.msra.mxu0 %v889
      %1170 = vmatprep.subr.bf16.mxu0 %v888
      %1171 = vmatpush1.bf16.msra.mxu0 %v887
      %1172 = vmatprep.subr.bf16.mxu0 %v886
      %1173 = vmatpush1.bf16.msra.mxu0 %v885
      %1174 = vmatprep.subr.bf16.mxu0 %v884
      %1175 = vmatpush1.bf16.msra.mxu0 %v883
      %1176 = vmatprep.subr.bf16.mxu0 %v882
      %1177 = vmatpush1.bf16.msra.mxu0 %v881
      %1178 = vmatprep.subr.bf16.mxu0 %v880
      %1179 = vmatpush1.bf16.msra.mxu0 %v879
      %1180 = vmatprep.subr.bf16.mxu0 %v878
      %1181 = vmatpush1.bf16.msra.mxu0 %v877
      %1182 = vmatprep.subr.bf16.mxu0 %v908
      %1183 = vmatpush2.bf16.msra.mxu0 %v907
      %1184 = vmatprep.subr.bf16.mxu0 %v906
      %1185 = vmatpush2.bf16.msra.mxu0 %v905
      %1186 = vmatprep.subr.bf16.mxu0 %v904
      %1187 = vmatpush2.bf16.msra.mxu0 %v903
      %1188 = vmatprep.subr.bf16.mxu0 %v902
      %1189 = vmatpush2.bf16.msra.mxu0 %v901
      %1190 = vmatprep.subr.bf16.mxu0 %v900
      %1191 = vmatpush2.bf16.msra.mxu0 %v899
      %1192 = vmatprep.subr.bf16.mxu0 %v898
      %1193 = vmatpush2.bf16.msra.mxu0 %v897
      %1194 = vmatprep.subr.bf16.mxu0 %v896
      %1195 = vmatpush2.bf16.msra.mxu0 %v895
      %1196 = vmatprep.subr.bf16.mxu0 %v894
      %1197 = vmatpush2.bf16.msra.mxu0 %v893
      %1198 = vmatprep.mubr.bf16.mxu0 %v528
      %1199 = vmatmul.mubr.bf16.gmra.mxu0 %v527
      %v1200 = vpop.f32.mrf.mxu0
      %v1201 = vadd.f32 %v1008, %v1200
      %v1202 = vpop.f32.mrf.mxu0
      %v1203 = vadd.f32 %v1010, %v1202
      %v1204 = vpop.f32.mrf.mxu0
      %v1205 = vadd.f32 %v1012, %v1204
      %v1206 = vpop.f32.mrf.mxu0
      %v1207 = vadd.f32 %v1014, %v1206
      %1208 = vmatprep.mubr.bf16.mxu0 %v532
      %1209 = vmatmul.mubr.bf16.gmra.mxu0 %v531
      %v1210 = vpop.f32.mrf.mxu0
      %v1211 = vadd.f32 %v1018, %v1210
      %v1212 = vpop.f32.mrf.mxu0
      %v1213 = vadd.f32 %v1020, %v1212
      %v1214 = vpop.f32.mrf.mxu0
      %v1215 = vadd.f32 %v1022, %v1214
      %v1216 = vpop.f32.mrf.mxu0
      %v1217 = vadd.f32 %v1024, %v1216
      %1218 = vmatprep.mubr.bf16.mxu0 %v536
      %1219 = vmatmul.mubr.bf16.gmra.mxu0 %v535
      %v1220 = vpop.f32.mrf.mxu0
      %v1221 = vadd.f32 %v1028, %v1220
      %v1222 = vpop.f32.mrf.mxu0
      %v1223 = vadd.f32 %v1030, %v1222
      %v1224 = vpop.f32.mrf.mxu0
      %v1225 = vadd.f32 %v1032, %v1224
      %v1226 = vpop.f32.mrf.mxu0
      %v1227 = vadd.f32 %v1034, %v1226
      %1228 = vmatprep.mubr.bf16.mxu0 %v540
      %1229 = vmatmul.mubr.bf16.gmra.mxu0 %v539
      %v1230 = vpop.f32.mrf.mxu0
      %v1231 = vadd.f32 %v1038, %v1230
      %v1232 = vpop.f32.mrf.mxu0
      %v1233 = vadd.f32 %v1040, %v1232
      %v1234 = vpop.f32.mrf.mxu0
      %v1235 = vadd.f32 %v1042, %v1234
      %v1236 = vpop.f32.mrf.mxu0
      %v1237 = vadd.f32 %v1044, %v1236
      %1238 = vmatprep.mubr.bf16.mxu0 %v544
      %1239 = vmatmul.mubr.bf16.gmra.mxu0 %v543
      %v1240 = vpop.f32.mrf.mxu0
      %v1241 = vadd.f32 %v1048, %v1240
      %v1242 = vpop.f32.mrf.mxu0
      %v1243 = vadd.f32 %v1050, %v1242
      %v1244 = vpop.f32.mrf.mxu0
      %v1245 = vadd.f32 %v1052, %v1244
      %v1246 = vpop.f32.mrf.mxu0
      %v1247 = vadd.f32 %v1054, %v1246
      %1248 = vmatprep.mubr.bf16.mxu0 %v548
      %1249 = vmatmul.mubr.bf16.gmra.mxu0 %v547
      %v1250 = vpop.f32.mrf.mxu0
      %v1251 = vadd.f32 %v1058, %v1250
      %v1252 = vpop.f32.mrf.mxu0
      %v1253 = vadd.f32 %v1060, %v1252
      %v1254 = vpop.f32.mrf.mxu0
      %v1255 = vadd.f32 %v1062, %v1254
      %v1256 = vpop.f32.mrf.mxu0
      %v1257 = vadd.f32 %v1064, %v1256
      %1258 = vmatprep.mubr.bf16.mxu0 %v552
      %1259 = vmatmul.mubr.bf16.gmra.mxu0 %v551
      %v1260 = vpop.f32.mrf.mxu0
      %v1261 = vadd.f32 %v1068, %v1260
      %v1262 = vpop.f32.mrf.mxu0
      %v1263 = vadd.f32 %v1070, %v1262
      %v1264 = vpop.f32.mrf.mxu0
      %v1265 = vadd.f32 %v1072, %v1264
      %v1266 = vpop.f32.mrf.mxu0
      %v1267 = vadd.f32 %v1074, %v1266
      %1268 = vmatprep.mubr.bf16.mxu0 %v556
      %1269 = vmatmul.mubr.bf16.gmra.mxu0 %v555
      %v1270 = vpop.f32.mrf.mxu0
      %v1271 = vadd.f32 %v1078, %v1270
      %v1272 = vpop.f32.mrf.mxu0
      %v1273 = vadd.f32 %v1080, %v1272
      %v1274 = vpop.f32.mrf.mxu0
      %v1275 = vadd.f32 %v1082, %v1274
      %v1276 = vpop.f32.mrf.mxu0
      %v1277 = vadd.f32 %v1084, %v1276
      %1278 = vmatprep.mubr.bf16.mxu0 %v560
      %1279 = vmatmul.mubr.bf16.gmra.mxu0 %v559
      %v1280 = vpop.f32.mrf.mxu0
      %v1281 = vadd.f32 %v1088, %v1280
      %v1282 = vpop.f32.mrf.mxu0
      %v1283 = vadd.f32 %v1090, %v1282
      %v1284 = vpop.f32.mrf.mxu0
      %v1285 = vadd.f32 %v1092, %v1284
      %v1286 = vpop.f32.mrf.mxu0
      %v1287 = vadd.f32 %v1094, %v1286
      %1288 = vmatprep.mubr.bf16.mxu0 %v564
      %1289 = vmatmul.mubr.bf16.gmra.mxu0 %v563
      %v1290 = vpop.f32.mrf.mxu0
      %v1291 = vadd.f32 %v1098, %v1290
      %v1292 = vpop.f32.mrf.mxu0
      %v1293 = vadd.f32 %v1100, %v1292
      %v1294 = vpop.f32.mrf.mxu0
      %v1295 = vadd.f32 %v1102, %v1294
      %v1296 = vpop.f32.mrf.mxu0
      %v1297 = vadd.f32 %v1104, %v1296
      %1298 = vmatprep.mubr.bf16.mxu0 %v568
      %1299 = vmatmul.mubr.bf16.gmra.mxu0 %v567
      %v1300 = vpop.f32.mrf.mxu0
      %v1301 = vadd.f32 %v1108, %v1300
      %v1302 = vpop.f32.mrf.mxu0
      %v1303 = vadd.f32 %v1110, %v1302
      %v1304 = vpop.f32.mrf.mxu0
      %v1305 = vadd.f32 %v1112, %v1304
      %v1306 = vpop.f32.mrf.mxu0
      %v1307 = vadd.f32 %v1114, %v1306
      %1308 = vmatprep.mubr.bf16.mxu0 %v572
      %1309 = vmatmul.mubr.bf16.gmra.mxu0 %v571
      %v1310 = vpop.f32.mrf.mxu0
      %v1311 = vadd.f32 %v1118, %v1310
      %v1312 = vpop.f32.mrf.mxu0
      %v1313 = vadd.f32 %v1120, %v1312
      %v1314 = vpop.f32.mrf.mxu0
      %v1315 = vadd.f32 %v1122, %v1314
      %v1316 = vpop.f32.mrf.mxu0
      %v1317 = vadd.f32 %v1124, %v1316
      %1318 = vmatprep.mubr.bf16.mxu0 %v576
      %1319 = vmatmul.mubr.bf16.gmra.mxu0 %v575
      %v1320 = vpop.f32.mrf.mxu0
      %v1321 = vadd.f32 %v1128, %v1320
      %v1322 = vpop.f32.mrf.mxu0
      %v1323 = vadd.f32 %v1130, %v1322
      %v1324 = vpop.f32.mrf.mxu0
      %v1325 = vadd.f32 %v1132, %v1324
      %v1326 = vpop.f32.mrf.mxu0
      %v1327 = vadd.f32 %v1134, %v1326
      %1328 = vmatprep.mubr.bf16.mxu0 %v580
      %1329 = vmatmul.mubr.bf16.gmra.mxu0 %v579
      %v1330 = vpop.f32.mrf.mxu0
      %v1331 = vadd.f32 %v1138, %v1330
      %v1332 = vpop.f32.mrf.mxu0
      %v1333 = vadd.f32 %v1140, %v1332
      %v1334 = vpop.f32.mrf.mxu0
      %v1335 = vadd.f32 %v1142, %v1334
      %v1336 = vpop.f32.mrf.mxu0
      %v1337 = vadd.f32 %v1144, %v1336
      %1338 = vmatprep.mubr.bf16.mxu0 %v584
      %1339 = vmatmul.mubr.bf16.gmra.mxu0 %v583
      %v1340 = vpop.f32.mrf.mxu0
      %v1341 = vadd.f32 %v1148, %v1340
      %v1342 = vpop.f32.mrf.mxu0
      %v1343 = vadd.f32 %v1150, %v1342
      %v1344 = vpop.f32.mrf.mxu0
      %v1345 = vadd.f32 %v1152, %v1344
      %v1346 = vpop.f32.mrf.mxu0
      %v1347 = vadd.f32 %v1154, %v1346
      %1348 = vmatprep.mubr.bf16.mxu0 %v588
      %1349 = vmatmul.mubr.bf16.gmra.mxu0 %v587
      %v1350 = vpop.f32.mrf.mxu0
      %v1351 = vadd.f32 %v1158, %v1350
      %v1352 = vpop.f32.mrf.mxu0
      %v1353 = vadd.f32 %v1160, %v1352
      %v1354 = vpop.f32.mrf.mxu0
      %v1355 = vadd.f32 %v1162, %v1354
      %v1356 = vpop.f32.mrf.mxu0
      %v1357 = vadd.f32 %v1164, %v1356
      %1358 = vdwg.mxu0
      %v1359 = vpack.c.bf16 %v1205, %v1201
      %v1360 = vpack.c.bf16 %v1207, %v1203
      %v1361 = vpack.c.bf16 %v1215, %v1211
      %v1362 = vpack.c.bf16 %v1217, %v1213
      %v1363 = vpack.c.bf16 %v1225, %v1221
      %v1364 = vpack.c.bf16 %v1227, %v1223
      %v1365 = vpack.c.bf16 %v1235, %v1231
      %v1366 = vpack.c.bf16 %v1237, %v1233
      %v1367 = vpack.c.bf16 %v1245, %v1241
      %v1368 = vpack.c.bf16 %v1247, %v1243
      %v1369 = vpack.c.bf16 %v1255, %v1251
      %v1370 = vpack.c.bf16 %v1257, %v1253
      %v1371 = vpack.c.bf16 %v1265, %v1261
      %v1372 = vpack.c.bf16 %v1267, %v1263
      %v1373 = vpack.c.bf16 %v1275, %v1271
      %v1374 = vpack.c.bf16 %v1277, %v1273
      %v1375 = vpack.c.bf16 %v1285, %v1281
      %v1376 = vpack.c.bf16 %v1287, %v1283
      %v1377 = vpack.c.bf16 %v1295, %v1291
      %v1378 = vpack.c.bf16 %v1297, %v1293
      %v1379 = vpack.c.bf16 %v1305, %v1301
      %v1380 = vpack.c.bf16 %v1307, %v1303
      %v1381 = vpack.c.bf16 %v1315, %v1311
      %v1382 = vpack.c.bf16 %v1317, %v1313
      %v1383 = vpack.c.bf16 %v1325, %v1321
      %v1384 = vpack.c.bf16 %v1327, %v1323
      %v1385 = vpack.c.bf16 %v1335, %v1331
      %v1386 = vpack.c.bf16 %v1337, %v1333
      %v1387 = vpack.c.bf16 %v1345, %v1341
      %v1388 = vpack.c.bf16 %v1347, %v1343
      %v1389 = vpack.c.bf16 %v1355, %v1351
      %v1390 = vpack.c.bf16 %v1357, %v1353
      %v1391 = vld [vmem:[%s2] sm:$0xf]
      %v1392 = vld [vmem:[%s2 + $0x4] sm:$0xf]
      %v1393 = vld [vmem:[%s2 + $0x8] sm:$0xf]
      %v1394 = vld [vmem:[%s2 + $0xc] sm:$0xf]
      %v1395 = vld [vmem:[%s2 + $0x10] sm:$0xf]
      %v1396 = vld [vmem:[%s2 + $0x14] sm:$0xf]
      %v1397 = vld [vmem:[%s2 + $0x18] sm:$0xf]
      %v1398 = vld [vmem:[%s2 + $0x1c] sm:$0xf]
      %v1399 = vld [vmem:[%s2 + $0x20] sm:$0xf]
      %v1400 = vld [vmem:[%s2 + $0x24] sm:$0xf]
      %v1401 = vld [vmem:[%s2 + $0x28] sm:$0xf]
      %v1402 = vld [vmem:[%s2 + $0x2c] sm:$0xf]
      %v1403 = vld [vmem:[%s2 + $0x30] sm:$0xf]
      %v1404 = vld [vmem:[%s2 + $0x34] sm:$0xf]
      %v1405 = vld [vmem:[%s2 + $0x38] sm:$0xf]
      %v1406 = vld [vmem:[%s2 + $0x3c] sm:$0xf]
      %v1407 = vld [vmem:[%s2 + $0x40] sm:$0xf]
      %v1408 = vld [vmem:[%s2 + $0x44] sm:$0xf]
      %v1409 = vld [vmem:[%s2 + $0x48] sm:$0xf]
      %v1410 = vld [vmem:[%s2 + $0x4c] sm:$0xf]
      %v1411 = vld [vmem:[%s2 + $0x50] sm:$0xf]
      %v1412 = vld [vmem:[%s2 + $0x54] sm:$0xf]
      %v1413 = vld [vmem:[%s2 + $0x58] sm:$0xf]
      %v1414 = vld [vmem:[%s2 + $0x5c] sm:$0xf]
      %v1415 = vld [vmem:[%s2 + $0x60] sm:$0xf]
      %v1416 = vld [vmem:[%s2 + $0x64] sm:$0xf]
      %v1417 = vld [vmem:[%s2 + $0x68] sm:$0xf]
      %v1418 = vld [vmem:[%s2 + $0x6c] sm:$0xf]
      %v1419 = vld [vmem:[%s2 + $0x70] sm:$0xf]
      %v1420 = vld [vmem:[%s2 + $0x74] sm:$0xf]
      %v1421 = vld [vmem:[%s2 + $0x78] sm:$0xf]
      %v1422 = vld [vmem:[%s2 + $0x7c] sm:$0xf]
      %v1423 = vld [vmem:[%s3] sm:$0x1]
      %v1425 = vlaneseq
      %v1426 = vshrl.u32 %v1425, 7
      %v1427 = vsub.s32 0, %v1426
      %v1428 = vrot.slane %v1423, %v1427
      %v1462 = vunpack.c.l.b16 %v1391
      %v1463 = vunpack.c.l.b16 %v1392
      %v1464 = vunpack.c.l.b16 %v1393
      %v1465 = vunpack.c.l.b16 %v1394
      %v1466 = vunpack.c.l.b16 %v1395
      %v1467 = vunpack.c.l.b16 %v1396
      %v1468 = vunpack.c.l.b16 %v1397
      %v1469 = vunpack.c.l.b16 %v1398
      %v1470 = vunpack.c.l.b16 %v1399
      %v1471 = vunpack.c.l.b16 %v1400
      %v1472 = vunpack.c.l.b16 %v1401
      %v1473 = vunpack.c.l.b16 %v1402
      %v1474 = vunpack.c.l.b16 %v1403
      %v1475 = vunpack.c.l.b16 %v1404
      %v1476 = vunpack.c.l.b16 %v1405
      %v1477 = vunpack.c.l.b16 %v1406
      %v1478 = vunpack.c.l.b16 %v1407
      %v1479 = vunpack.c.l.b16 %v1408
      %v1480 = vunpack.c.l.b16 %v1409
      %v1481 = vunpack.c.l.b16 %v1410
      %v1482 = vunpack.c.l.b16 %v1411
      %v1483 = vunpack.c.l.b16 %v1412
      %v1484 = vunpack.c.l.b16 %v1413
      %v1485 = vunpack.c.l.b16 %v1414
      %v1486 = vunpack.c.l.b16 %v1415
      %v1487 = vunpack.c.l.b16 %v1416
      %v1488 = vunpack.c.l.b16 %v1417
      %v1489 = vunpack.c.l.b16 %v1418
      %v1490 = vunpack.c.l.b16 %v1419
      %v1491 = vunpack.c.l.b16 %v1420
      %v1492 = vunpack.c.l.b16 %v1421
      %v1493 = vunpack.c.l.b16 %v1422
      %v1494 = vpack.c.b16 %v1463, %v1462
      %v1495 = vpack.c.b16 %v1465, %v1464
      %v1496 = vpack.c.b16 %v1467, %v1466
      %v1497 = vpack.c.b16 %v1469, %v1468
      %v1498 = vpack.c.b16 %v1471, %v1470
      %v1499 = vpack.c.b16 %v1473, %v1472
      %v1500 = vpack.c.b16 %v1475, %v1474
      %v1501 = vpack.c.b16 %v1477, %v1476
      %v1502 = vpack.c.b16 %v1479, %v1478
      %v1503 = vpack.c.b16 %v1481, %v1480
      %v1504 = vpack.c.b16 %v1483, %v1482
      %v1505 = vpack.c.b16 %v1485, %v1484
      %v1506 = vpack.c.b16 %v1487, %v1486
      %v1507 = vpack.c.b16 %v1489, %v1488
      %v1508 = vpack.c.b16 %v1491, %v1490
      %v1509 = vpack.c.b16 %v1493, %v1492
      %1526 = vmatprep.subr.bf16.mxu0 0
      %1527 = vmatpush1.bf16.msra.mxu0 %v1501
      %1528 = vmatprep.subr.bf16.mxu0 0
      %1529 = vmatpush1.bf16.msra.mxu0 %v1500
      %1530 = vmatprep.subr.bf16.mxu0 0
      %1531 = vmatpush1.bf16.msra.mxu0 %v1499
      %1532 = vmatprep.subr.bf16.mxu0 0
      %1533 = vmatpush1.bf16.msra.mxu0 %v1498
      %1534 = vmatprep.subr.bf16.mxu0 0
      %1535 = vmatpush1.bf16.msra.mxu0 %v1497
      %1536 = vmatprep.subr.bf16.mxu0 0
      %1537 = vmatpush1.bf16.msra.mxu0 %v1496
      %1538 = vmatprep.subr.bf16.mxu0 0
      %1539 = vmatpush1.bf16.msra.mxu0 %v1495
      %1540 = vmatprep.subr.bf16.mxu0 0
      %1541 = vmatpush1.bf16.msra.mxu0 %v1494
      %1542 = vmatprep.subr.bf16.mxu0 0
      %1543 = vmatpush2.bf16.msra.mxu0 %v1509
      %1544 = vmatprep.subr.bf16.mxu0 0
      %1545 = vmatpush2.bf16.msra.mxu0 %v1508
      %1546 = vmatprep.subr.bf16.mxu0 0
      %1547 = vmatpush2.bf16.msra.mxu0 %v1507
      %1548 = vmatprep.subr.bf16.mxu0 0
      %1549 = vmatpush2.bf16.msra.mxu0 %v1506
      %1550 = vmatprep.subr.bf16.mxu0 0
      %1551 = vmatpush2.bf16.msra.mxu0 %v1505
      %1552 = vmatprep.subr.bf16.mxu0 0
      %1553 = vmatpush2.bf16.msra.mxu0 %v1504
      %1554 = vmatprep.subr.bf16.mxu0 0
      %1555 = vmatpush2.bf16.msra.mxu0 %v1503
      %1556 = vmatprep.subr.bf16.mxu0 0
      %1557 = vmatpush2.bf16.msra.mxu0 %v1502
      %1558 = vmatprep.mubr.bf16.mxu0 %v1360
      %1559 = vmatmul.mubr.bf16.gmra.mxu0 %v1359
      %v1560 = vpop.f32.mrf.mxu0
      %v1561 = vadd.f32 %v1428, %v1560
      %v1562 = vpop.f32.mrf.mxu0
      %v1563 = vpop.f32.mrf.mxu0
      %v1564 = vadd.f32 %v1428, %v1563
      %v1565 = vpop.f32.mrf.mxu0
      %1566 = vmatprep.mubr.bf16.mxu0 %v1362
      %1567 = vmatmul.mubr.bf16.gmra.mxu0 %v1361
      %v1568 = vpop.f32.mrf.mxu0
      %v1569 = vadd.f32 %v1428, %v1568
      %v1570 = vpop.f32.mrf.mxu0
      %v1571 = vpop.f32.mrf.mxu0
      %v1572 = vadd.f32 %v1428, %v1571
      %v1573 = vpop.f32.mrf.mxu0
      %1574 = vmatprep.mubr.bf16.mxu0 %v1364
      %1575 = vmatmul.mubr.bf16.gmra.mxu0 %v1363
      %v1576 = vpop.f32.mrf.mxu0
      %v1577 = vadd.f32 %v1428, %v1576
      %v1578 = vpop.f32.mrf.mxu0
      %v1579 = vpop.f32.mrf.mxu0
      %v1580 = vadd.f32 %v1428, %v1579
      %v1581 = vpop.f32.mrf.mxu0
      %1582 = vmatprep.mubr.bf16.mxu0 %v1366
      %1583 = vmatmul.mubr.bf16.gmra.mxu0 %v1365
      %v1584 = vpop.f32.mrf.mxu0
      %v1585 = vadd.f32 %v1428, %v1584
      %v1586 = vpop.f32.mrf.mxu0
      %v1587 = vpop.f32.mrf.mxu0
      %v1588 = vadd.f32 %v1428, %v1587
      %v1589 = vpop.f32.mrf.mxu0
      %1590 = vmatprep.mubr.bf16.mxu0 %v1368
      %1591 = vmatmul.mubr.bf16.gmra.mxu0 %v1367
      %v1592 = vpop.f32.mrf.mxu0
      %v1593 = vadd.f32 %v1428, %v1592
      %v1594 = vpop.f32.mrf.mxu0
      %v1595 = vpop.f32.mrf.mxu0
      %v1596 = vadd.f32 %v1428, %v1595
      %v1597 = vpop.f32.mrf.mxu0
      %1598 = vmatprep.mubr.bf16.mxu0 %v1370
      %1599 = vmatmul.mubr.bf16.gmra.mxu0 %v1369
      %v1600 = vpop.f32.mrf.mxu0
      %v1601 = vadd.f32 %v1428, %v1600
      %v1602 = vpop.f32.mrf.mxu0
      %v1603 = vpop.f32.mrf.mxu0
      %v1604 = vadd.f32 %v1428, %v1603
      %v1605 = vpop.f32.mrf.mxu0
      %1606 = vmatprep.mubr.bf16.mxu0 %v1372
      %1607 = vmatmul.mubr.bf16.gmra.mxu0 %v1371
      %v1608 = vpop.f32.mrf.mxu0
      %v1609 = vadd.f32 %v1428, %v1608
      %v1610 = vpop.f32.mrf.mxu0
      %v1611 = vpop.f32.mrf.mxu0
      %v1612 = vadd.f32 %v1428, %v1611
      %v1613 = vpop.f32.mrf.mxu0
      %1614 = vmatprep.mubr.bf16.mxu0 %v1374
      %1615 = vmatmul.mubr.bf16.gmra.mxu0 %v1373
      %v1616 = vpop.f32.mrf.mxu0
      %v1617 = vadd.f32 %v1428, %v1616
      %v1618 = vpop.f32.mrf.mxu0
      %v1619 = vpop.f32.mrf.mxu0
      %v1620 = vadd.f32 %v1428, %v1619
      %v1621 = vpop.f32.mrf.mxu0
      %1622 = vmatprep.mubr.bf16.mxu0 %v1376
      %1623 = vmatmul.mubr.bf16.gmra.mxu0 %v1375
      %v1624 = vpop.f32.mrf.mxu0
      %v1625 = vadd.f32 %v1428, %v1624
      %v1626 = vpop.f32.mrf.mxu0
      %v1627 = vpop.f32.mrf.mxu0
      %v1628 = vadd.f32 %v1428, %v1627
      %v1629 = vpop.f32.mrf.mxu0
      %1630 = vmatprep.mubr.bf16.mxu0 %v1378
      %1631 = vmatmul.mubr.bf16.gmra.mxu0 %v1377
      %v1632 = vpop.f32.mrf.mxu0
      %v1633 = vadd.f32 %v1428, %v1632
      %v1634 = vpop.f32.mrf.mxu0
      %v1635 = vpop.f32.mrf.mxu0
      %v1636 = vadd.f32 %v1428, %v1635
      %v1637 = vpop.f32.mrf.mxu0
      %1638 = vmatprep.mubr.bf16.mxu0 %v1380
      %1639 = vmatmul.mubr.bf16.gmra.mxu0 %v1379
      %v1640 = vpop.f32.mrf.mxu0
      %v1641 = vadd.f32 %v1428, %v1640
      %v1642 = vpop.f32.mrf.mxu0
      %v1643 = vpop.f32.mrf.mxu0
      %v1644 = vadd.f32 %v1428, %v1643
      %v1645 = vpop.f32.mrf.mxu0
      %1646 = vmatprep.mubr.bf16.mxu0 %v1382
      %1647 = vmatmul.mubr.bf16.gmra.mxu0 %v1381
      %v1648 = vpop.f32.mrf.mxu0
      %v1649 = vadd.f32 %v1428, %v1648
      %v1650 = vpop.f32.mrf.mxu0
      %v1651 = vpop.f32.mrf.mxu0
      %v1652 = vadd.f32 %v1428, %v1651
      %v1653 = vpop.f32.mrf.mxu0
      %1654 = vmatprep.mubr.bf16.mxu0 %v1384
      %1655 = vmatmul.mubr.bf16.gmra.mxu0 %v1383
      %v1656 = vpop.f32.mrf.mxu0
      %v1657 = vadd.f32 %v1428, %v1656
      %v1658 = vpop.f32.mrf.mxu0
      %v1659 = vpop.f32.mrf.mxu0
      %v1660 = vadd.f32 %v1428, %v1659
      %v1661 = vpop.f32.mrf.mxu0
      %1662 = vmatprep.mubr.bf16.mxu0 %v1386
      %1663 = vmatmul.mubr.bf16.gmra.mxu0 %v1385
      %v1664 = vpop.f32.mrf.mxu0
      %v1665 = vadd.f32 %v1428, %v1664
      %v1666 = vpop.f32.mrf.mxu0
      %v1667 = vpop.f32.mrf.mxu0
      %v1668 = vadd.f32 %v1428, %v1667
      %v1669 = vpop.f32.mrf.mxu0
      %1670 = vmatprep.mubr.bf16.mxu0 %v1388
      %1671 = vmatmul.mubr.bf16.gmra.mxu0 %v1387
      %v1672 = vpop.f32.mrf.mxu0
      %v1673 = vadd.f32 %v1428, %v1672
      %v1674 = vpop.f32.mrf.mxu0
      %v1675 = vpop.f32.mrf.mxu0
      %v1676 = vadd.f32 %v1428, %v1675
      %v1677 = vpop.f32.mrf.mxu0
      %1678 = vmatprep.mubr.bf16.mxu0 %v1390
      %1679 = vmatmul.mubr.bf16.gmra.mxu0 %v1389
      %v1680 = vpop.f32.mrf.mxu0
      %v1681 = vadd.f32 %v1428, %v1680
      %v1682 = vpop.f32.mrf.mxu0
      %v1683 = vpop.f32.mrf.mxu0
      %v1684 = vadd.f32 %v1428, %v1683
      %v1685 = vpop.f32.mrf.mxu0
      %1686 = vdwg.mxu0
      %1687 = vst [vmem:[%s202] sm:$0xff] %v1561
      %1688 = vst [vmem:[%s202 + $0x8] sm:$0xff] %v1564
      %1689 = vst [vmem:[%s202 + $0x10] sm:$0xff] %v1569
      %1690 = vst [vmem:[%s202 + $0x18] sm:$0xff] %v1572
      %1691 = vst [vmem:[%s202 + $0x20] sm:$0xff] %v1577
      %1692 = vst [vmem:[%s202 + $0x28] sm:$0xff] %v1580
      %1693 = vst [vmem:[%s202 + $0x30] sm:$0xff] %v1585
      %1694 = vst [vmem:[%s202 + $0x38] sm:$0xff] %v1588
      %1695 = vst [vmem:[%s202 + $0x40] sm:$0xff] %v1593
      %1696 = vst [vmem:[%s202 + $0x48] sm:$0xff] %v1596
      %1697 = vst [vmem:[%s202 + $0x50] sm:$0xff] %v1601
      %1698 = vst [vmem:[%s202 + $0x58] sm:$0xff] %v1604
      %1699 = vst [vmem:[%s202 + $0x60] sm:$0xff] %v1609
      %1700 = vst [vmem:[%s202 + $0x68] sm:$0xff] %v1612
      %1701 = vst [vmem:[%s202 + $0x70] sm:$0xff] %v1617
      %1702 = vst [vmem:[%s202 + $0x78] sm:$0xff] %v1620
      %1703 = vst [vmem:[%s202 + $0x80] sm:$0xff] %v1625
      %1704 = vst [vmem:[%s202 + $0x88] sm:$0xff] %v1628
      %1705 = vst [vmem:[%s202 + $0x90] sm:$0xff] %v1633
      %1706 = vst [vmem:[%s202 + $0x98] sm:$0xff] %v1636
      %1707 = vst [vmem:[%s202 + $0xa0] sm:$0xff] %v1641
      %1708 = vst [vmem:[%s202 + $0xa8] sm:$0xff] %v1644
      %1709 = vst [vmem:[%s202 + $0xb0] sm:$0xff] %v1649
      %1710 = vst [vmem:[%s202 + $0xb8] sm:$0xff] %v1652
      %1711 = vst [vmem:[%s202 + $0xc0] sm:$0xff] %v1657
      %1712 = vst [vmem:[%s202 + $0xc8] sm:$0xff] %v1660
      %1713 = vst [vmem:[%s202 + $0xd0] sm:$0xff] %v1665
      %1714 = vst [vmem:[%s202 + $0xd8] sm:$0xff] %v1668
      %1715 = vst [vmem:[%s202 + $0xe0] sm:$0xff] %v1673
      %1716 = vst [vmem:[%s202 + $0xe8] sm:$0xff] %v1676
      %1717 = vst [vmem:[%s202 + $0xf0] sm:$0xff] %v1681
      %1718 = vst [vmem:[%s202 + $0xf8] sm:$0xff] %v1684
      %s1719 = smul.u32 32, %s15
      %p1720 = scmp.lt.s32.totalorder %s1719, 63
      %s1721 = scalar_select %p1720, %s1719, 63
      %s1722 = smul.addr %s1721, 8
      %s1723 = scalar_lea.vmem %s4, %s1722
      // Predicated region
      $region37: #{gcn_encoder_forward.3} parent=35 // pred_check
        %p1724 = pneg %p122
      $region38: #{gcn_encoder_forward.3} parent=35 // pred_check_branch
        %1726 = sbr.rel (%p1724) target = $region40
      $region39: #{gcn_encoder_forward.3} parent=35 // pred_region
        %s1727 = smul.u32 32, %s15
      $region40: #{gcn_encoder_forward.3} parent=35 // pred_fallthru
        _
    $region36: #{gcn_encoder_forward.3} parent=5 // pred_fallthru
      _
    %p1728 = scmp.le.s32.totalorder 2, %s10
    // Predicated region
    $region41: #{gcn_encoder_forward.3} parent=5 // pred_check
      %p1729 = pneg %p1728
    $region42: #{gcn_encoder_forward.3} parent=5 // pred_check_branch
      %1731 = sbr.rel (%p1729) target = $region44
    $region43: #{gcn_encoder_forward.3} parent=5 // pred_region
      %s1732 = ssub.s32 %s10, 2
      // Predicated region
      $region45: #{gcn_encoder_forward.3} parent=43 // pred_check
        %p1733 = pneg %p128
      $region46: #{gcn_encoder_forward.3} parent=43 // pred_check_branch
        %1735 = sbr.rel (%p1733) target = $region48
      $region47: #{gcn_encoder_forward.3} parent=43 // pred_region
        %s1736 = smul.u32 32, %s16
        %p1737 = scmp.lt.s32.totalorder %s1736, 63
        %s1738 = scalar_select %p1737, %s1736, 63
        %s1739 = smul.addr %s1738, 8
        %s1740 = scalar_lea.vmem %s4, %s1739
      $region48: #{gcn_encoder_forward.3} parent=43 // pred_fallthru
        _
    $region44: #{gcn_encoder_forward.3} parent=5 // pred_fallthru
      _
  $region6: #{gcn_encoder_forward.3} parent=0 // loop_footer
    %s14 = sadd.s32 1, %s10
  $region7: #{gcn_encoder_forward.3} parent=0 // loop_footer_branch
    %9 = sbr.rel target = $region3
  $region8: #{gcn_encoder_forward.3} parent=0 // loop_exit
    _

</llo_original>
